<compile_context>
chip_gen: v7x
topology: tpu7x:2x2x1
jax: 0.10.0
libtpu: 0.0.40
codegen_flags: <defaults>
</compile_context>

<pallas_src>
import functools

import jax
import jax.numpy as jnp
from jax.experimental import pallas as pl
from jax.experimental.pallas import tpu as pltpu


_LANE = 128
_MXU_ROWS = 256                        # target M rows (v6e/v7x MXU); >=128 fills v5e
_VMEM_TILE_BUDGET = 32 * 1024 * 1024   # per-step working-set budget (fits v7x)
_VMEM_LIMIT_CAP = 48 * 1024 * 1024     # below v7x's 64 MiB physical VMEM


def _round_up(n, m):
    return ((n + m - 1) // m) * m


def _choose_tiles(B, C, T, itemsize):
    """Pick (ct, tb, C_pad, T_pad, vmem_estimate)."""
    sub = max(8, 32 // itemsize)       # sublane packing: 8 f32 / 16 bf16 / 32 int8

    # Time tile: lane-dense (multiple of 128) so output stores are unmasked.
    T_pad = _round_up(T, _LANE)
    tb = 256 if T_pad % 256 == 0 else _LANE

    # Channel tile: fill the MXU M dimension; prefer an even, unpadded split.
    C_pad = _round_up(C, sub)
    ct = min(_MXU_ROWS, C_pad)
    if C_pad % ct:
        best = None
        d = sub
        while d <= min(C_pad, _MXU_ROWS):
            if C_pad % d == 0:
                best = d
            d += sub
        if best is not None and best >= 64:
            ct = best                         # e.g. C=384 -> ct=192, no padding
        else:
            C_pad = _round_up(C_pad, ct)      # otherwise pad channels up

    # v7x has 2 TensorCores: keep >= 2 channel grid steps when it costs little
    # (M stays >= 128, so v5e/v6e MXU rows remain filled too).
    if C_pad // ct == 1 and ct % (2 * sub) == 0 and ct // 2 >= 128:
        ct //= 2

    def est(ct_, tb_):
        io = 2 * 2 * B * ct_ * tb_ * itemsize             # double-buffered x + out
        tri = 2 * tb_ * tb_ * 4                           # resident cumsum operator
        work = 5 * B * ct_ * tb_ * 4 + 8 * ct_ * tb_ * 4  # f32 temporaries (rough)
        return io + tri + work

    # Shrink to the VMEM budget (matters most on v7x's 64 MiB physical VMEM).
    while est(ct, tb) > _VMEM_TILE_BUDGET:
        if tb > _LANE:
            tb //= 2
        elif ct > sub:
            ct = max(sub, _round_up(ct // 2, sub))
        else:
            break

    C_pad = _round_up(C_pad, ct)
    T_pad = _round_up(T_pad, tb)
    return ct, tb, C_pad, T_pad, est(ct, tb)


def _causal_bn_kernel(gb_ref, tri_ref, x_ref, o_ref, sum_c, d2_c, *,
                      eps, batch_size):
    # gb_ref : (2,) f32 in SMEM -> [gamma, beta]
    # tri_ref: (Tb, Tb) f32 in VMEM, tri[s, t] = 1.0 if s <= t (cumsum operator)
    # x_ref / o_ref: (B, Ct, Tb) blocks in VMEM
    # sum_c / d2_c : (Ct, 1) f32 scratch -- prefix sums carried across T blocks
    t_blk = pl.program_id(1)

    @pl.when(t_blk == 0)
    def _():
        sum_c[...] = jnp.zeros_like(sum_c)
        d2_c[...] = jnp.zeros_like(d2_c)

    x = x_ref[...].astype(jnp.float32)                        # (B, Ct, Tb)
    tb = x.shape[-1]
    tri = tri_ref[...]                                        # (Tb, Tb)

    # cumulative element counts: (global_t + 1) * B, reciprocal computed once
    t_idx = jax.lax.broadcasted_iota(jnp.int32, (1, tb), 1) + t_blk * tb + 1
    inv_counts = pl.reciprocal(
        t_idx.astype(jnp.float32) * jnp.float32(batch_size))  # (1, Tb)

    # cumulative mean: carried prefix + within-block cumsum (MXU matmul)
    x_sum_b = jnp.sum(x, axis=0)                              # (Ct, Tb)
    cum_sum = sum_c[...] + jnp.dot(x_sum_b, tri,
                                   preferred_element_type=jnp.float32)
    cum_mean = cum_sum * inv_counts                           # (Ct, Tb)

    # cumulative variance using the per-timestep cumulative mean
    d = x - cum_mean[None, :, :]                              # (B, Ct, Tb)
    d2_sum_b = jnp.sum(d * d, axis=0)                         # (Ct, Tb)
    d2_cum = d2_c[...] + jnp.dot(d2_sum_b, tri,
                                 preferred_element_type=jnp.float32)
    cum_std = jnp.sqrt(d2_cum * inv_counts + eps) + eps
    # Exact reciprocal keeps the 1e-4 tolerance; approx=True would push it to
    # the (otherwise idle) EUP at a small numerics cost.
    inv_std = pl.reciprocal(cum_std)                          # (Ct, Tb)

    gamma = gb_ref[0]
    beta = gb_ref[1]
    o_ref[...] = (d * inv_std[None, :, :] * gamma + beta).astype(o_ref.dtype)

    # carry the full prefix sums into the next T block
    sum_c[...] = cum_sum[:, tb - 1:]
    d2_c[...] = d2_cum[:, tb - 1:]


def causal_batch_norm(x, gamma, beta, eps=1e-8):
    """x: (B, C, T); gamma/beta: scalar parameters (shape (1,) like torch)."""
    B, C, T = x.shape
    itemsize = jnp.dtype(x.dtype).itemsize
    ct, tb, C_pad, T_pad, est = _choose_tiles(B, C, T, itemsize)

    xp = x
    if (C_pad, T_pad) != (C, T):
        # Right-padding T with zeros is safe: the normalization is causal, so
        # real timesteps never see padded ones. Padded channels are cropped.
        xp = jnp.pad(x, ((0, 0), (0, C_pad - C), (0, T_pad - T)))

    idx = jnp.arange(tb)
    tri = (idx[:, None] <= idx[None, :]).astype(jnp.float32)     # (Tb, Tb)

    gb = jnp.concatenate([jnp.asarray(gamma, jnp.float32).reshape(1),
                          jnp.asarray(beta, jnp.float32).reshape(1)])

    kernel = functools.partial(_causal_bn_kernel, eps=float(eps), batch_size=B)
    vmem_limit = int(min(max(2 * est, 32 * 1024 * 1024), _VMEM_LIMIT_CAP))

    out = pl.pallas_call(
        kernel,
        out_shape=jax.ShapeDtypeStruct((B, C_pad, T_pad), x.dtype),
        grid=(C_pad // ct, T_pad // tb),
        in_specs=[
            pl.BlockSpec(memory_space=pltpu.MemorySpace.SMEM),     # gamma/beta
            pl.BlockSpec((tb, tb), lambda c, t: (0, 0)),           # tri, resident
            pl.BlockSpec((B, ct, tb), lambda c, t: (0, c, t)),     # x
        ],
        out_specs=pl.BlockSpec((B, ct, tb), lambda c, t: (0, c, t)),
        scratch_shapes=[
            pltpu.VMEM((ct, 1), jnp.float32),   # running sum_{b,t'} x
            pltpu.VMEM((ct, 1), jnp.float32),   # running sum_{b,t'} (x - mean)^2
        ],
        compiler_params=pltpu.CompilerParams(
            dimension_semantics=("parallel", "arbitrary"),
            vmem_limit_bytes=vmem_limit),
    )(gb, tri, xp)

    if (C_pad, T_pad) != (C, T):
        out = out[:, :C, :T]
    return out


def _reference(x, gamma, beta, eps=1e-8):
    """Pure-JAX port of the PyTorch forward (f32 accumulation), for checking."""
    B, C, T = x.shape
    xf = x.astype(jnp.float32)
    counts = jnp.arange(1, T + 1, dtype=jnp.float32) * B           # (T,)
    cum_sum = jnp.cumsum(xf, axis=-1).sum(axis=0)[None]            # (1, C, T)
    cum_mean = cum_sum / counts
    cum_var = jnp.cumsum((xf - cum_mean) ** 2, axis=-1).sum(axis=0)[None] / counts
    cum_std = jnp.sqrt(cum_var + eps) + eps
    out = (xf - cum_mean) / cum_std * jnp.asarray(gamma, jnp.float32) \
        + jnp.asarray(beta, jnp.float32)
    return out.astype(x.dtype)


if __name__ == "__main__":
    key = jax.random.PRNGKey(0)
    gamma = jnp.ones((1,), jnp.float32)    # matches torch: gamma=ones(1)
    beta = jnp.zeros((1,), jnp.float32)    # beta=zeros(1)
    eps = 1e-8

    # Main check: 2 channel tiles (ct=192) x 2 carried time blocks (tb=256).
    B, C, T = 2, 384, 512
    x = jax.random.normal(key, (B, C, T), dtype=jnp.float32)
    out = jax.block_until_ready(causal_batch_norm(x, gamma, beta, eps))
    ref = _reference(x, gamma, beta, eps)
    assert out.shape == ref.shape and out.dtype == ref.dtype
    assert jnp.allclose(out, ref, rtol=1e-4, atol=1e-4), "mismatch vs reference"

    # Awkward shape: exercises channel (20->24) and time (50->128) padding/crop.
    x2 = jax.random.normal(jax.random.PRNGKey(1), (2, 20, 50), dtype=jnp.float32)
    out2 = jax.block_until_ready(causal_batch_norm(x2, gamma, beta, eps))
    ref2 = _reference(x2, gamma, beta, eps)
    assert out2.shape == ref2.shape and out2.dtype == ref2.dtype
    assert jnp.allclose(out2, ref2, rtol=1e-4, atol=1e-4), "mismatch (padded case)"

    print("KERNEL_OK")
</pallas_src>

<mosaic_0001>
module attributes {stable_mosaic.version = 11 : i64} {
  func.func @_causal_bn_kernel(%arg0: i32, %arg1: i32, %arg2: memref<2xf32, #tpu.memory_space<smem>>, %arg3: memref<256x256xf32, #tpu.memory_space<vmem>>, %arg4: memref<2x192x256xf32, #tpu.memory_space<vmem>>, %arg5: memref<2x192x256xf32, #tpu.memory_space<vmem>>, %arg6: memref<192x1xf32, #tpu.memory_space<vmem>>, %arg7: memref<192x1xf32, #tpu.memory_space<vmem>>) attributes {dimension_semantics = [#tpu.dimension_semantics<parallel>, #tpu.dimension_semantics<arbitrary>], iteration_bounds = array<i64: 2, 2>, scalar_prefetch = 0 : i64, scratch_operands = 2 : i64, tpu.core_type = #tpu.core_type<tc>, window_params = [{transform_indices = @transform_0, window_bounds = array<i64: 2>}, {pipeline_mode = #tpu.pipeline_mode<synchronous>, transform_indices = @transform_1, window_bounds = array<i64: 256, 256>}, {transform_indices = @transform_2, window_bounds = array<i64: 2, 192, 256>}, {transform_indices = @transform_3, window_bounds = array<i64: 2, 192, 256>}]} {
    %c0_i32 = arith.constant 0 : i32
    %0 = arith.cmpi eq, %arg1, %c0_i32 : i32
    %1 = arith.extui %0 : i1 to i32
    %c0_i32_0 = arith.constant 0 : i32
    %2 = arith.cmpi ne, %1, %c0_i32_0 : i32
    scf.if %2 {
      %cst_23 = arith.constant 0.000000e+00 : f32
      %53 = vector.broadcast %cst_23 : f32 to vector<192x1xf32>
      %c0_24 = arith.constant 0 : index
      %c0_25 = arith.constant 0 : index
      %54 = vector.load %arg6[%c0_24, %c0_25] : memref<192x1xf32, #tpu.memory_space<vmem>>, vector<192x1xf32>
      tpu.vector_store %arg6[%c0_24, %c0_25], %53 {strides = array<i32>} : memref<192x1xf32, #tpu.memory_space<vmem>>, vector<192x1xf32>,
      %cst_26 = arith.constant 0.000000e+00 : f32
      %55 = vector.broadcast %cst_26 : f32 to vector<192x1xf32>
      %c0_27 = arith.constant 0 : index
      %c0_28 = arith.constant 0 : index
      %56 = vector.load %arg7[%c0_27, %c0_28] : memref<192x1xf32, #tpu.memory_space<vmem>>, vector<192x1xf32>
      tpu.vector_store %arg7[%c0_27, %c0_28], %55 {strides = array<i32>} : memref<192x1xf32, #tpu.memory_space<vmem>>, vector<192x1xf32>,
    } else {
    }
    %c0 = arith.constant 0 : index
    %c0_1 = arith.constant 0 : index
    %c0_2 = arith.constant 0 : index
    %3 = vector.load %arg4[%c0, %c0_1, %c0_2] : memref<2x192x256xf32, #tpu.memory_space<vmem>>, vector<2x192x256xf32>
    %c0_3 = arith.constant 0 : index
    %c0_4 = arith.constant 0 : index
    %4 = vector.load %arg3[%c0_3, %c0_4] : memref<256x256xf32, #tpu.memory_space<vmem>>, vector<256x256xf32>
    %5 = tpu.iota {dimensions = array<i32: 1>} : vector<1x256xi32>
    %c256_i32 = arith.constant 256 : i32
    %6 = arith.muli %arg1, %c256_i32 : i32
    %7 = vector.broadcast %6 : i32 to vector<1x256xi32>
    %8 = arith.addi %5, %7 : vector<1x256xi32>
    %c1_i32 = arith.constant 1 : i32
    %9 = vector.broadcast %c1_i32 : i32 to vector<1x256xi32>
    %10 = arith.addi %8, %9 : vector<1x256xi32>
    %11 = arith.sitofp %10 : vector<1x256xi32> to vector<1x256xf32>
    %cst = arith.constant 2.000000e+00 : f32
    %12 = vector.broadcast %cst : f32 to vector<1x256xf32>
    %13 = arith.mulf %11, %12 : vector<1x256xf32>
    %14 = tpu.reciprocal %13 : vector<1x256xf32> -> vector<1x256xf32>
    %cst_5 = arith.constant dense<0.000000e+00> : vector<192x256xf32>
    %15 = vector.multi_reduction <add>, %3, %cst_5 [0] : vector<2x192x256xf32> to vector<192x256xf32>
    %c0_6 = arith.constant 0 : index
    %c0_7 = arith.constant 0 : index
    %16 = vector.load %arg6[%c0_6, %c0_7] : memref<192x1xf32, #tpu.memory_space<vmem>>, vector<192x1xf32>
    %cst_8 = arith.constant dense<0.000000e+00> : vector<192x256xf32>
    %17 = tpu.matmul %15, %4, %cst_8 {dimension_numbers = #tpu.dot_dimension_numbers<[1], [0], [0], [1], [0, 0, 1, 1], [], []>} : vector<192x256xf32>, vector<256x256xf32>, vector<192x256xf32> -> vector<192x256xf32>
    %18 = vector.broadcast %16 : vector<192x1xf32> to vector<192x256xf32>
    %19 = arith.addf %18, %17 : vector<192x256xf32>
    %20 = vector.broadcast %14 : vector<1x256xf32> to vector<192x256xf32>
    %21 = arith.mulf %19, %20 : vector<192x256xf32>
    %22 = vector.shape_cast %21 : vector<192x256xf32> to vector<1x192x256xf32>
    %23 = vector.broadcast %22 : vector<1x192x256xf32> to vector<2x192x256xf32>
    %24 = arith.subf %3, %23 : vector<2x192x256xf32>
    %25 = arith.mulf %24, %24 : vector<2x192x256xf32>
    %cst_9 = arith.constant dense<0.000000e+00> : vector<192x256xf32>
    %26 = vector.multi_reduction <add>, %25, %cst_9 [0] : vector<2x192x256xf32> to vector<192x256xf32>
    %c0_10 = arith.constant 0 : index
    %c0_11 = arith.constant 0 : index
    %27 = vector.load %arg7[%c0_10, %c0_11] : memref<192x1xf32, #tpu.memory_space<vmem>>, vector<192x1xf32>
    %cst_12 = arith.constant dense<0.000000e+00> : vector<192x256xf32>
    %28 = tpu.matmul %26, %4, %cst_12 {dimension_numbers = #tpu.dot_dimension_numbers<[1], [0], [0], [1], [0, 0, 1, 1], [], []>} : vector<192x256xf32>, vector<256x256xf32>, vector<192x256xf32> -> vector<192x256xf32>
    %29 = vector.broadcast %27 : vector<192x1xf32> to vector<192x256xf32>
    %30 = arith.addf %29, %28 : vector<192x256xf32>
    %31 = vector.broadcast %14 : vector<1x256xf32> to vector<192x256xf32>
    %32 = arith.mulf %30, %31 : vector<192x256xf32>
    %cst_13 = arith.constant 9.99999993E-9 : f32
    %33 = vector.broadcast %cst_13 : f32 to vector<192x256xf32>
    %34 = arith.addf %32, %33 : vector<192x256xf32>
    %35 = math.sqrt %34 : vector<192x256xf32>
    %cst_14 = arith.constant 9.99999993E-9 : f32
    %36 = vector.broadcast %cst_14 : f32 to vector<192x256xf32>
    %37 = arith.addf %35, %36 : vector<192x256xf32>
    %38 = tpu.reciprocal %37 : vector<192x256xf32> -> vector<192x256xf32>
    %c0_15 = arith.constant 0 : index
    %39 = memref.load %arg2[%c0_15] : memref<2xf32, #tpu.memory_space<smem>>
    %c1 = arith.constant 1 : index
    %40 = memref.load %arg2[%c1] : memref<2xf32, #tpu.memory_space<smem>>
    %41 = vector.shape_cast %38 : vector<192x256xf32> to vector<1x192x256xf32>
    %42 = vector.broadcast %41 : vector<1x192x256xf32> to vector<2x192x256xf32>
    %43 = arith.mulf %24, %42 : vector<2x192x256xf32>
    %44 = vector.broadcast %39 : f32 to vector<2x192x256xf32>
    %45 = arith.mulf %43, %44 : vector<2x192x256xf32>
    %46 = vector.broadcast %40 : f32 to vector<2x192x256xf32>
    %47 = arith.addf %45, %46 : vector<2x192x256xf32>
    %c0_16 = arith.constant 0 : index
    %c0_17 = arith.constant 0 : index
    %c0_18 = arith.constant 0 : index
    %48 = vector.load %arg5[%c0_16, %c0_17, %c0_18] : memref<2x192x256xf32, #tpu.memory_space<vmem>>, vector<2x192x256xf32>
    tpu.vector_store %arg5[%c0_16, %c0_17, %c0_18], %47 {strides = array<i32>} : memref<2x192x256xf32, #tpu.memory_space<vmem>>, vector<2x192x256xf32>,
    %49 = vector.extract_strided_slice %19 {offsets = [0, 255], sizes = [192, 1], strides = [1, 1]} : vector<192x256xf32> to vector<192x1xf32>
    %c0_19 = arith.constant 0 : index
    %c0_20 = arith.constant 0 : index
    %50 = vector.load %arg6[%c0_19, %c0_20] : memref<192x1xf32, #tpu.memory_space<vmem>>, vector<192x1xf32>
    tpu.vector_store %arg6[%c0_19, %c0_20], %49 {strides = array<i32>} : memref<192x1xf32, #tpu.memory_space<vmem>>, vector<192x1xf32>,
    %51 = vector.extract_strided_slice %30 {offsets = [0, 255], sizes = [192, 1], strides = [1, 1]} : vector<192x256xf32> to vector<192x1xf32>
    %c0_21 = arith.constant 0 : index
    %c0_22 = arith.constant 0 : index
    %52 = vector.load %arg7[%c0_21, %c0_22] : memref<192x1xf32, #tpu.memory_space<vmem>>, vector<192x1xf32>
    tpu.vector_store %arg7[%c0_21, %c0_22], %51 {strides = array<i32>} : memref<192x1xf32, #tpu.memory_space<vmem>>, vector<192x1xf32>,
    return
  }
  func.func @transform_0(%arg0: i32, %arg1: i32) -> i32 {
    %c0_i32 = arith.constant 0 : i32
    %c0_i32_0 = arith.constant 0 : i32
    return %c0_i32 : i32
  }
  func.func @transform_1(%arg0: i32, %arg1: i32) -> (i32, i32) {
    %c0_i32 = arith.constant 0 : i32
    %c0_i32_0 = arith.constant 0 : i32
    %c0_i32_1 = arith.constant 0 : i32
    return %c0_i32, %c0_i32_0 : i32, i32
  }
  func.func @transform_2(%arg0: i32, %arg1: i32) -> (i32, i32, i32) {
    %c0_i32 = arith.constant 0 : i32
    %c0_i32_0 = arith.constant 0 : i32
    return %c0_i32, %arg0, %arg1 : i32, i32, i32
  }
  func.func @transform_3(%arg0: i32, %arg1: i32) -> (i32, i32, i32) {
    %c0_i32 = arith.constant 0 : i32
    %c0_i32_0 = arith.constant 0 : i32
    return %c0_i32, %arg0, %arg1 : i32, i32, i32
  }
}

</mosaic_0001>

<llo_original>
// kernel: tpu_custom_call.1
$region0: #{tpu_custom_call.1}
  #allocation0 [shape = 'u32[]', space=smem, size = 0x4, offset = 0x4, fixed_abs, tag = 'smem constant byte address 0x4 - core index']
  #allocation1 [shape = 'u32[144,128]{1,0:T(1,128)}', space=vmem, size = 0x12000, scoped, tag = 'internal scratch']
  #allocation2 [shape = 'f32[192,1]{1,0:T(8,128)}', space=vmem, size = 0x18000, scoped, tag = 'scratch operand']
  #allocation3 [shape = 'f32[192,1]{1,0:T(8,128)}', space=vmem, size = 0x18000, scoped, tag = 'scratch operand']
  #allocation12 [shape = 's32[]', space=sflag, size = 0x4, offset = 0, fixed_abs, tag = 'sflag constant byte address 0x0 - dummy sync flag']
  #allocation14 [shape = 's32[]', space=sflag, size = 0x4, offset = 0, fixed_abs, tag = 'sflag constant byte address 0x0 - dummy sync flag']
  %s0 = inlined_call_operand.hbm [shape: f32[2], index: 0, kind: input, shape index: {}]
  %s1 = inlined_call_operand.hbm [shape: f32[256,256], index: 1, kind: input, shape index: {}]
  %s2 = inlined_call_operand.hbm [shape: f32[2,384,512], index: 2, kind: input, shape index: {}]
  %s3 = inlined_call_operand.hbm [shape: f32[2,384,512], index: 3, kind: output, shape index: {}]
  %s4 = sld [smem:[#allocation0]]
  $region61: #{tpu_custom_call.1} parent=0
    _
  %s6 = ssub.s32 1, %s4
  %s7 = scalar_select 0, %s6, %s4
  $region1: #{tpu_custom_call.1} parent=0
    #allocation4 [shape = 'u8[512]{0}', space=smem, size = 0x200, scoped, tag = 'input window, operand 0, single buffered']
    #allocation5 [shape = 's32[2]{0}', space=sflag, size = 0x8, scoped, tag = 'scoped memory for tpu_custom_call.1']
    #allocation6 [shape = 's32[2]{0}', space=sflag, size = 0x8, scoped, tag = 'scoped memory for tpu_custom_call.1']
    #allocation7 [shape = 's32[2]{0}', space=sflag, size = 0x8, scoped, tag = 'scoped memory for tpu_custom_call.1']
    #allocation8 [shape = 'u8[262144]{0}', space=vmem, size = 0x40000, scoped, tag = 'input window, operand 1, single buffered']
    #allocation9 [shape = 'u8[786432]{0}', space=vmem, size = 0xc0000, scoped, tag = 'input window, operand 2']
    #allocation10 [shape = 's32[2]{0}', space=sflag, size = 0x8, scoped, tag = 'scoped memory for tpu_custom_call.1']
    #allocation11 [shape = 'u8[786432]{0}', space=vmem, size = 0xc0000, scoped, tag = 'output window, operand 0']
    %8 = vsyncpa [#allocation7], 0
    %9 = vsyncpa [#allocation5], 0
    %10 = vsyncpa [#allocation10], 0
    %s11 = scalar_lea.sflag [#allocation10], 1
    %12 = vsyncpa %s11, 0
    %13 = vsyncpa [#allocation6], 0
    %s14 = scalar_lea.sflag [#allocation6], 1
    %15 = vsyncpa %s14, 0
    loop: start=0, step=1, limit=6
    $region2: #{tpu_custom_call.1} parent=1 // loop_pre_header
      _
    $region3: #{tpu_custom_call.1} parent=1 // loop_header
      %s17 = sphi 0, %s21
      %p18 = scmp.ge.s32.totalorder %s17, 6
      %s24 = sphi 0, %s36
      %s25 = sphi 0, %s32
      %s26 = sphi 0, %s24
      %s27 = sphi 0, %s25
      %s28 = sphi 0, %s26
      %s29 = sphi 0, %s27
      %s37 = sphi 0, %s37
      %s39 = sphi 0, %s37
      %s40 = sphi 0, %s39
      %s54 = sphi 0, %s40
      %s58 = sphi 0, %s58
      %s60 = sphi 0, %s58
      %s61 = sphi 0, %s60
      %s75 = sphi 0, %s61
      %s83 = sphi 0, %s85
      %s86 = sphi 0, %s83
      %s87 = sphi 0, %s86
      %s103 = sphi 0, %s87
      %s111 = sphi 0, %s113
      %s114 = sphi 0, %s111
      %s115 = sphi 0, %s114
      %s131 = sphi 0, %s115
    $region4: #{tpu_custom_call.1} parent=1 // loop_header_branch
      %20 = sbr.rel (%p18) target = $region8
    $region5: #{tpu_custom_call.1} parent=1 // loop_body
      %s22 = ssub.s32 %s17, 1
      %s23 = ssub.s32 %s17, 2
      %s30 = sadd.s32 1, %s25
      %p31 = scmp.ge.s32.totalorder %s30, 2
      %s32 = scalar_select %p31, 0, %s30
      %s33 = sadd.s32 1, %s24
      %s34 = scalar_select %p31, %s33, %s24
      %p35 = scmp.ge.s32.totalorder %s34, 2
      %s36 = scalar_select %p35, 0, %s34
      %s38 = sadd.s32 %s37, 1
      %p41 = scmp.eq.s32.totalorder %s17, 3
      %p42 = scmp.ne.s32.totalorder %s37, %s39
      %p43 = scmp.eq.s32.totalorder %s17, 0
      %p44 = por %p42, %p43
      %p45 = scmp.ne.s32.totalorder %s37, %s39
      %p46 = scmp.eq.s32.totalorder %s22, 3
      %p47 = por %p45, %p46
      %p48 = scmp.ne.s32.totalorder %s39, %s40
      %p49 = scmp.eq.s32.totalorder %s22, 0
      %p50 = por %p48, %p49
      %p51 = scmp.ne.s32.totalorder %s39, %s40
      %p52 = scmp.eq.s32.totalorder %s23, 3
      %p53 = por %p51, %p52
      %p55 = scmp.ne.s32.totalorder %s40, %s54
      %p56 = scmp.eq.s32.totalorder %s23, 0
      %p57 = por %p55, %p56
      %s59 = sadd.s32 %s58, 1
      %p62 = scmp.eq.s32.totalorder %s17, 3
      %p63 = scmp.ne.s32.totalorder %s58, %s60
      %p64 = scmp.eq.s32.totalorder %s17, 0
      %p65 = por %p63, %p64
      %p66 = scmp.ne.s32.totalorder %s58, %s60
      %p67 = scmp.eq.s32.totalorder %s22, 3
      %p68 = por %p66, %p67
      %p69 = scmp.ne.s32.totalorder %s60, %s61
      %p70 = scmp.eq.s32.totalorder %s22, 0
      %p71 = por %p69, %p70
      %p72 = scmp.ne.s32.totalorder %s60, %s61
      %p73 = scmp.eq.s32.totalorder %s23, 3
      %p74 = por %p72, %p73
      %p76 = scmp.ne.s32.totalorder %s61, %s75
      %p77 = scmp.eq.s32.totalorder %s23, 0
      %p78 = por %p76, %p77
      %s79 = ssub.s32 %s24, %s36
      %s80 = ssub.s32 %s25, %s32
      %s81 = sor.u32 %s79, %s80
      %p82 = scmp.eq.s32.totalorder %s81, 0
      %s84 = sadd.s32 %s83, 1
      %s85 = scalar_select %p82, %s83, %s84
      %p88 = pneg %p82
      %p89 = scmp.eq.s32.totalorder %s17, 3
      %p90 = por %p88, %p89
      %p91 = scmp.ne.s32.totalorder %s83, %s86
      %p92 = scmp.eq.s32.totalorder %s17, 0
      %p93 = por %p91, %p92
      %p94 = scmp.ne.s32.totalorder %s83, %s86
      %p95 = scmp.eq.s32.totalorder %s22, 3
      %p96 = por %p94, %p95
      %p97 = scmp.ne.s32.totalorder %s86, %s87
      %p98 = scmp.eq.s32.totalorder %s22, 0
      %p99 = por %p97, %p98
      %p100 = scmp.ne.s32.totalorder %s86, %s87
      %p101 = scmp.eq.s32.totalorder %s23, 3
      %p102 = por %p100, %p101
      %p104 = scmp.ne.s32.totalorder %s87, %s103
      %p105 = scmp.eq.s32.totalorder %s23, 0
      %p106 = por %p104, %p105
      %s107 = ssub.s32 %s24, %s36
      %s108 = ssub.s32 %s25, %s32
      %s109 = sor.u32 %s107, %s108
      %p110 = scmp.eq.s32.totalorder %s109, 0
      %s112 = sadd.s32 %s111, 1
      %s113 = scalar_select %p110, %s111, %s112
      %p116 = pneg %p110
      %p117 = scmp.eq.s32.totalorder %s17, 3
      %p118 = por %p116, %p117
      %p119 = scmp.ne.s32.totalorder %s111, %s114
      %p120 = scmp.eq.s32.totalorder %s17, 0
      %p121 = por %p119, %p120
      %p122 = scmp.ne.s32.totalorder %s111, %s114
      %p123 = scmp.eq.s32.totalorder %s22, 3
      %p124 = por %p122, %p123
      %p125 = scmp.ne.s32.totalorder %s114, %s115
      %p126 = scmp.eq.s32.totalorder %s22, 0
      %p127 = por %p125, %p126
      %p128 = scmp.ne.s32.totalorder %s114, %s115
      %p129 = scmp.eq.s32.totalorder %s23, 3
      %p130 = por %p128, %p129
      %p132 = scmp.ne.s32.totalorder %s115, %s131
      %p133 = scmp.eq.s32.totalorder %s23, 0
      %p134 = por %p132, %p133
      %p135 = scmp.le.s32.totalorder 1, %s17
      %p136 = scmp.lt.s32.totalorder %s17, 5
      %p137 = pnand %p135, %p136
      %p138 = pneg %p137
      // Predicated region
      $region9: #{tpu_custom_call.1} parent=5 // pred_check
        _
      $region10: #{tpu_custom_call.1} parent=5 // pred_check_branch
        %140 = sbr.rel (%p137) target = $region12
      $region11: #{tpu_custom_call.1} parent=5 // pred_region
        %s141 = ssub.s32 %s17, 1
        // Predicated region
        $region13: #{tpu_custom_call.1} parent=11 // pred_check
          %p142 = pneg %p50
        $region14: #{tpu_custom_call.1} parent=11 // pred_check_branch
          %144 = sbr.rel (%p142) target = $region16
        $region15: #{tpu_custom_call.1} parent=11 // pred_region
          %s146 = ssub.s32 16, 16
          %147 = vsyncadd [#allocation7], %s146
          %150 = dma.hbm_to_smem %s0, 16, [#allocation4], [#allocation7]
        $region16: #{tpu_custom_call.1} parent=11 // pred_fallthru
          _
        // Predicated region
        $region17: #{tpu_custom_call.1} parent=11 // pred_check
          %p151 = pneg %p71
        $region18: #{tpu_custom_call.1} parent=11 // pred_check_branch
          %153 = sbr.rel (%p151) target = $region20
        $region19: #{tpu_custom_call.1} parent=11 // pred_region
          %s155 = ssub.s32 8192, 8192
          %156 = vsyncadd [#allocation5], %s155
          %s157 = sshll.u32 [#allocation8], 4
          %s158 = int_to_ptr.vmem [resolvable:$true] %s157
          %163 = dma.hbm_to_vmem [thread:$0]  %s1, 8192, %s158, [#allocation5], 256, 256, 16
        $region20: #{tpu_custom_call.1} parent=11 // pred_fallthru
          _
      $region12: #{tpu_custom_call.1} parent=5 // pred_fallthru
        _
      %p164 = scmp.lt.s32.totalorder %s17, 4
      // Predicated region
      $region21: #{tpu_custom_call.1} parent=5 // pred_check
        %p165 = pneg %p164
      $region22: #{tpu_custom_call.1} parent=5 // pred_check_branch
        %167 = sbr.rel (%p165) target = $region24
      $region23: #{tpu_custom_call.1} parent=5 // pred_region
        // Predicated region
        $region25: #{tpu_custom_call.1} parent=23 // pred_check
          %p168 = pneg %p93
        $region26: #{tpu_custom_call.1} parent=23 // pred_check_branch
          %170 = sbr.rel (%p168) target = $region28
        $region27: #{tpu_custom_call.1} parent=23 // pred_region
          #allocation13 [shape = 'u32[6]{0}', space=smem, size = 0x18, scoped, tag = 'DMA stride descriptor']
          %s171 = sand.u32 %s83, 1
          %s172 = scalar_lea.sflag [#allocation10], %s171
          %s173 = sand.u32 %s83, 1
          %s174 = smul.addr %s173, 768
          %s175 = scalar_lea.vmem [#allocation9], %s174
          %s176 = smul.u32 24, %s24
          %s177 = smul.u32 2, %s25
          %s179 = ssub.s32 12288, 12288
          %180 = vsyncadd %s172, %s179
          %s181 = smul.addr %s176, 4
          %s182 = sadd.s32 %s177, %s181
          %s183 = smul.addr %s182, 128
          %s184 = scalar_lea.hbm %s2, %s183
          %s186 = sshll.u32 1, 14
          %s187 = sxor.u32 4294967295, %s186
          %s189 = sld [smem:[#allocation0]]
          %s190 = sadd.s32 2, %s189
          %s192 = sshll.u32 7, 26
          %s193 = sxor.u32 4294967295, %s192
          %s194 = sand.u32 0, %s193
          %s195 = sshll.u32 %s190, 26
          %s196 = sor.u32 %s194, %s195
          %s197 = sshll.u32 %s175, 4
          %s198 = int_to_ptr.vmem [resolvable:$true] %s197
          %204 = sst [smem:[#allocation13]] 24576
          %s205 = scalar_lea.smem [#allocation13], 1
          %206 = sst [smem:[%s205]] 6144
          %s207 = scalar_lea.smem [#allocation13], 2
          %208 = sst [smem:[%s207]] 24
          %s209 = scalar_lea.smem [#allocation13], 3
          %210 = sst [smem:[%s209]] 512
          %s211 = scalar_lea.smem [#allocation13], 4
          %212 = sst [smem:[%s211]] 256
          %s213 = scalar_lea.smem [#allocation13], 5
          %214 = sst [smem:[%s213]] 16
          %216 = dma.general %s184, 12288, %s198, %s172, [#allocation12], [#allocation13], %s196, 0
        $region28: #{tpu_custom_call.1} parent=23 // pred_fallthru
          _
      $region24: #{tpu_custom_call.1} parent=5 // pred_fallthru
        _
      %p217 = scmp.le.s32.totalorder 1, %s17
      %p218 = scmp.lt.s32.totalorder %s17, 5
      %p219 = pnand %p217, %p218
      %p220 = pneg %p219
      // Predicated region
      $region29: #{tpu_custom_call.1} parent=5 // pred_check
        _
      $region30: #{tpu_custom_call.1} parent=5 // pred_check_branch
        %222 = sbr.rel (%p219) target = $region32
      $region31: #{tpu_custom_call.1} parent=5 // pred_region
        %s223 = ssub.s32 %s17, 1
        // Predicated region
        $region33: #{tpu_custom_call.1} parent=31 // pred_check
          %p224 = pneg %p50
        $region34: #{tpu_custom_call.1} parent=31 // pred_check_branch
          %226 = sbr.rel (%p224) target = $region36
        $region35: #{tpu_custom_call.1} parent=31 // pred_region
          %227 = dma.done [#allocation7], 16
        $region36: #{tpu_custom_call.1} parent=31 // pred_fallthru
          _
        // Predicated region
        $region37: #{tpu_custom_call.1} parent=31 // pred_check
          %p228 = pneg %p71
        $region38: #{tpu_custom_call.1} parent=31 // pred_check_branch
          %230 = sbr.rel (%p228) target = $region40
        $region39: #{tpu_custom_call.1} parent=31 // pred_region
          %231 = dma.done [#allocation5], 8192
        $region40: #{tpu_custom_call.1} parent=31 // pred_fallthru
          _
        %s232 = sand.u32 %s86, 1
        %s233 = scalar_lea.sflag [#allocation10], %s232
        %s234 = sand.u32 %s86, 1
        %s235 = smul.addr %s234, 768
        %s236 = scalar_lea.vmem [#allocation9], %s235
        // Predicated region
        $region41: #{tpu_custom_call.1} parent=31 // pred_check
          %p237 = pneg %p99
        $region42: #{tpu_custom_call.1} parent=31 // pred_check_branch
          %239 = sbr.rel (%p237) target = $region44
        $region43: #{tpu_custom_call.1} parent=31 // pred_region
          %240 = dma.done %s233, 12288
        $region44: #{tpu_custom_call.1} parent=31 // pred_fallthru
          _
        %241 = sfence
        %p242 = pneg %p50
        %p243 = pneg %p47
        %p244 = pneg %p71
        %p245 = pneg %p68
        %s246 = sand.u32 %s86, 1
        %s247 = scalar_lea.sflag [#allocation10], %s246
        %s248 = sand.u32 %s86, 1
        %s249 = smul.addr %s248, 768
        %s250 = scalar_lea.vmem [#allocation9], %s249
        %p251 = pneg %p99
        %p252 = pneg %p96
        %p253 = pneg %p127
        %p254 = pneg %p124
        %s255 = sand.u32 %s114, 1
        %s256 = scalar_lea.sflag [#allocation6], %s255
        %s257 = sand.u32 %s114, 1
        %s258 = smul.addr %s257, 768
        %s259 = scalar_lea.vmem [#allocation11], %s258
        %s260 = smul.u32 24, %s26
        %s261 = smul.u32 2, %s27
        %s262 = smul.u32 24, %s26
        %s263 = smul.u32 2, %s27
        %p264 = scmp.eq.s32.totalorder %s27, 0
        // Predicated region
        $region45: #{tpu_custom_call.1} parent=31 // pred_check
          %p265 = pneg %p264
        $region46: #{tpu_custom_call.1} parent=31 // pred_check_branch
          %267 = sbr.rel (%p265) target = $region48
        $region47: #{tpu_custom_call.1} parent=31 // pred_region
          %vm268 = vcmask 7168
          %269 = vst.msk [vmem:[#allocation2] sm:$0xff] %vm268, 0.0
          %270 = vst.msk [vmem:[#allocation2 + $0x8] sm:$0xff] %vm268, 0.0
          %271 = vst.msk [vmem:[#allocation2 + $0x10] sm:$0xff] %vm268, 0.0
          %272 = vst.msk [vmem:[#allocation2 + $0x18] sm:$0xff] %vm268, 0.0
          %273 = vst.msk [vmem:[#allocation2 + $0x20] sm:$0xff] %vm268, 0.0
          %274 = vst.msk [vmem:[#allocation2 + $0x28] sm:$0xff] %vm268, 0.0
          %275 = vst.msk [vmem:[#allocation2 + $0x30] sm:$0xff] %vm268, 0.0
          %276 = vst.msk [vmem:[#allocation2 + $0x38] sm:$0xff] %vm268, 0.0
          %277 = vst.msk [vmem:[#allocation2 + $0x40] sm:$0xff] %vm268, 0.0
          %278 = vst.msk [vmem:[#allocation2 + $0x48] sm:$0xff] %vm268, 0.0
          %279 = vst.msk [vmem:[#allocation2 + $0x50] sm:$0xff] %vm268, 0.0
          %280 = vst.msk [vmem:[#allocation2 + $0x58] sm:$0xff] %vm268, 0.0
          %281 = vst.msk [vmem:[#allocation2 + $0x60] sm:$0xff] %vm268, 0.0
          %282 = vst.msk [vmem:[#allocation2 + $0x68] sm:$0xff] %vm268, 0.0
          %283 = vst.msk [vmem:[#allocation2 + $0x70] sm:$0xff] %vm268, 0.0
          %284 = vst.msk [vmem:[#allocation2 + $0x78] sm:$0xff] %vm268, 0.0
          %285 = vst.msk [vmem:[#allocation2 + $0x80] sm:$0xff] %vm268, 0.0
          %286 = vst.msk [vmem:[#allocation2 + $0x88] sm:$0xff] %vm268, 0.0
          %287 = vst.msk [vmem:[#allocation2 + $0x90] sm:$0xff] %vm268, 0.0
          %288 = vst.msk [vmem:[#allocation2 + $0x98] sm:$0xff] %vm268, 0.0
          %289 = vst.msk [vmem:[#allocation2 + $0xa0] sm:$0xff] %vm268, 0.0
          %290 = vst.msk [vmem:[#allocation2 + $0xa8] sm:$0xff] %vm268, 0.0
          %291 = vst.msk [vmem:[#allocation2 + $0xb0] sm:$0xff] %vm268, 0.0
          %292 = vst.msk [vmem:[#allocation2 + $0xb8] sm:$0xff] %vm268, 0.0
          %293 = vst.msk [vmem:[#allocation3] sm:$0xff] %vm268, 0.0
          %294 = vst.msk [vmem:[#allocation3 + $0x8] sm:$0xff] %vm268, 0.0
          %295 = vst.msk [vmem:[#allocation3 + $0x10] sm:$0xff] %vm268, 0.0
          %296 = vst.msk [vmem:[#allocation3 + $0x18] sm:$0xff] %vm268, 0.0
          %297 = vst.msk [vmem:[#allocation3 + $0x20] sm:$0xff] %vm268, 0.0
          %298 = vst.msk [vmem:[#allocation3 + $0x28] sm:$0xff] %vm268, 0.0
          %299 = vst.msk [vmem:[#allocation3 + $0x30] sm:$0xff] %vm268, 0.0
          %300 = vst.msk [vmem:[#allocation3 + $0x38] sm:$0xff] %vm268, 0.0
          %301 = vst.msk [vmem:[#allocation3 + $0x40] sm:$0xff] %vm268, 0.0
          %302 = vst.msk [vmem:[#allocation3 + $0x48] sm:$0xff] %vm268, 0.0
          %303 = vst.msk [vmem:[#allocation3 + $0x50] sm:$0xff] %vm268, 0.0
          %304 = vst.msk [vmem:[#allocation3 + $0x58] sm:$0xff] %vm268, 0.0
          %305 = vst.msk [vmem:[#allocation3 + $0x60] sm:$0xff] %vm268, 0.0
          %306 = vst.msk [vmem:[#allocation3 + $0x68] sm:$0xff] %vm268, 0.0
          %307 = vst.msk [vmem:[#allocation3 + $0x70] sm:$0xff] %vm268, 0.0
          %308 = vst.msk [vmem:[#allocation3 + $0x78] sm:$0xff] %vm268, 0.0
          %309 = vst.msk [vmem:[#allocation3 + $0x80] sm:$0xff] %vm268, 0.0
          %310 = vst.msk [vmem:[#allocation3 + $0x88] sm:$0xff] %vm268, 0.0
          %311 = vst.msk [vmem:[#allocation3 + $0x90] sm:$0xff] %vm268, 0.0
          %312 = vst.msk [vmem:[#allocation3 + $0x98] sm:$0xff] %vm268, 0.0
          %313 = vst.msk [vmem:[#allocation3 + $0xa0] sm:$0xff] %vm268, 0.0
          %314 = vst.msk [vmem:[#allocation3 + $0xa8] sm:$0xff] %vm268, 0.0
          %315 = vst.msk [vmem:[#allocation3 + $0xb0] sm:$0xff] %vm268, 0.0
          %316 = vst.msk [vmem:[#allocation3 + $0xb8] sm:$0xff] %vm268, 0.0
        $region48: #{tpu_custom_call.1} parent=31 // pred_fallthru
          _
        %v317 = vld [vmem:[%s236] sm:$0xff]
        %v318 = vld [vmem:[%s236 + $0x8] sm:$0xff]
        %v319 = vld [vmem:[%s236 + $0x10] sm:$0xff]
        %v320 = vld [vmem:[%s236 + $0x18] sm:$0xff]
        %v321 = vld [vmem:[%s236 + $0x20] sm:$0xff]
        %v322 = vld [vmem:[%s236 + $0x28] sm:$0xff]
        %v323 = vld [vmem:[%s236 + $0x30] sm:$0xff]
        %v324 = vld [vmem:[%s236 + $0x38] sm:$0xff]
        %v325 = vld [vmem:[%s236 + $0x40] sm:$0xff]
        %v326 = vld [vmem:[%s236 + $0x48] sm:$0xff]
        %v327 = vld [vmem:[%s236 + $0x50] sm:$0xff]
        %v328 = vld [vmem:[%s236 + $0x58] sm:$0xff]
        %v329 = vld [vmem:[%s236 + $0x60] sm:$0xff]
        %v330 = vld [vmem:[%s236 + $0x68] sm:$0xff]
        %v331 = vld [vmem:[%s236 + $0x70] sm:$0xff]
        %v332 = vld [vmem:[%s236 + $0x78] sm:$0xff]
        %v333 = vld [vmem:[%s236 + $0x80] sm:$0xff]
        %v334 = vld [vmem:[%s236 + $0x88] sm:$0xff]
        %v335 = vld [vmem:[%s236 + $0x90] sm:$0xff]
        %v336 = vld [vmem:[%s236 + $0x98] sm:$0xff]
        %v337 = vld [vmem:[%s236 + $0xa0] sm:$0xff]
        %v338 = vld [vmem:[%s236 + $0xa8] sm:$0xff]
        %v339 = vld [vmem:[%s236 + $0xb0] sm:$0xff]
        %v340 = vld [vmem:[%s236 + $0xb8] sm:$0xff]
        %v341 = vld [vmem:[%s236 + $0xc0] sm:$0xff]
        %v342 = vld [vmem:[%s236 + $0xc8] sm:$0xff]
        %v343 = vld [vmem:[%s236 + $0xd0] sm:$0xff]
        %v344 = vld [vmem:[%s236 + $0xd8] sm:$0xff]
        %v345 = vld [vmem:[%s236 + $0xe0] sm:$0xff]
        %v346 = vld [vmem:[%s236 + $0xe8] sm:$0xff]
        %v347 = vld [vmem:[%s236 + $0xf0] sm:$0xff]
        %v348 = vld [vmem:[%s236 + $0xf8] sm:$0xff]
        %v349 = vld [vmem:[%s236 + $0x100] sm:$0xff]
        %v350 = vld [vmem:[%s236 + $0x108] sm:$0xff]
        %v351 = vld [vmem:[%s236 + $0x110] sm:$0xff]
        %v352 = vld [vmem:[%s236 + $0x118] sm:$0xff]
        %v353 = vld [vmem:[%s236 + $0x120] sm:$0xff]
        %v354 = vld [vmem:[%s236 + $0x128] sm:$0xff]
        %v355 = vld [vmem:[%s236 + $0x130] sm:$0xff]
        %v356 = vld [vmem:[%s236 + $0x138] sm:$0xff]
        %v357 = vld [vmem:[%s236 + $0x140] sm:$0xff]
        %v358 = vld [vmem:[%s236 + $0x148] sm:$0xff]
        %v359 = vld [vmem:[%s236 + $0x150] sm:$0xff]
        %v360 = vld [vmem:[%s236 + $0x158] sm:$0xff]
        %v361 = vld [vmem:[%s236 + $0x160] sm:$0xff]
        %v362 = vld [vmem:[%s236 + $0x168] sm:$0xff]
        %v363 = vld [vmem:[%s236 + $0x170] sm:$0xff]
        %v364 = vld [vmem:[%s236 + $0x178] sm:$0xff]
        %v365 = vld [vmem:[%s236 + $0x180] sm:$0xff]
        %v366 = vld [vmem:[%s236 + $0x188] sm:$0xff]
        %v367 = vld [vmem:[%s236 + $0x190] sm:$0xff]
        %v368 = vld [vmem:[%s236 + $0x198] sm:$0xff]
        %v369 = vld [vmem:[%s236 + $0x1a0] sm:$0xff]
        %v370 = vld [vmem:[%s236 + $0x1a8] sm:$0xff]
        %v371 = vld [vmem:[%s236 + $0x1b0] sm:$0xff]
        %v372 = vld [vmem:[%s236 + $0x1b8] sm:$0xff]
        %v373 = vld [vmem:[%s236 + $0x1c0] sm:$0xff]
        %v374 = vld [vmem:[%s236 + $0x1c8] sm:$0xff]
        %v375 = vld [vmem:[%s236 + $0x1d0] sm:$0xff]
        %v376 = vld [vmem:[%s236 + $0x1d8] sm:$0xff]
        %v377 = vld [vmem:[%s236 + $0x1e0] sm:$0xff]
        %v378 = vld [vmem:[%s236 + $0x1e8] sm:$0xff]
        %v379 = vld [vmem:[%s236 + $0x1f0] sm:$0xff]
        %v380 = vld [vmem:[%s236 + $0x1f8] sm:$0xff]
        %v381 = vld [vmem:[%s236 + $0x200] sm:$0xff]
        %v382 = vld [vmem:[%s236 + $0x208] sm:$0xff]
        %v383 = vld [vmem:[%s236 + $0x210] sm:$0xff]
        %v384 = vld [vmem:[%s236 + $0x218] sm:$0xff]
        %v385 = vld [vmem:[%s236 + $0x220] sm:$0xff]
        %v386 = vld [vmem:[%s236 + $0x228] sm:$0xff]
        %v387 = vld [vmem:[%s236 + $0x230] sm:$0xff]
        %v388 = vld [vmem:[%s236 + $0x238] sm:$0xff]
        %v389 = vld [vmem:[%s236 + $0x240] sm:$0xff]
        %v390 = vld [vmem:[%s236 + $0x248] sm:$0xff]
        %v391 = vld [vmem:[%s236 + $0x250] sm:$0xff]
        %v392 = vld [vmem:[%s236 + $0x258] sm:$0xff]
        %v393 = vld [vmem:[%s236 + $0x260] sm:$0xff]
        %v394 = vld [vmem:[%s236 + $0x268] sm:$0xff]
        %v395 = vld [vmem:[%s236 + $0x270] sm:$0xff]
        %v396 = vld [vmem:[%s236 + $0x278] sm:$0xff]
        %v397 = vld [vmem:[%s236 + $0x280] sm:$0xff]
        %v398 = vld [vmem:[%s236 + $0x288] sm:$0xff]
        %v399 = vld [vmem:[%s236 + $0x290] sm:$0xff]
        %v400 = vld [vmem:[%s236 + $0x298] sm:$0xff]
        %v401 = vld [vmem:[%s236 + $0x2a0] sm:$0xff]
        %v402 = vld [vmem:[%s236 + $0x2a8] sm:$0xff]
        %v403 = vld [vmem:[%s236 + $0x2b0] sm:$0xff]
        %v404 = vld [vmem:[%s236 + $0x2b8] sm:$0xff]
        %v405 = vld [vmem:[%s236 + $0x2c0] sm:$0xff]
        %v406 = vld [vmem:[%s236 + $0x2c8] sm:$0xff]
        %v407 = vld [vmem:[%s236 + $0x2d0] sm:$0xff]
        %v408 = vld [vmem:[%s236 + $0x2d8] sm:$0xff]
        %v409 = vld [vmem:[%s236 + $0x2e0] sm:$0xff]
        %v410 = vld [vmem:[%s236 + $0x2e8] sm:$0xff]
        %v411 = vld [vmem:[%s236 + $0x2f0] sm:$0xff]
        %v412 = vld [vmem:[%s236 + $0x2f8] sm:$0xff]
        %v413 = vld [vmem:[#allocation8] sm:$0xff]
        %v414 = vld [vmem:[#allocation8 + $0x8] sm:$0xff]
        %v415 = vld [vmem:[#allocation8 + $0x10] sm:$0xff]
        %v416 = vld [vmem:[#allocation8 + $0x18] sm:$0xff]
        %v417 = vld [vmem:[#allocation8 + $0x20] sm:$0xff]
        %v418 = vld [vmem:[#allocation8 + $0x28] sm:$0xff]
        %v419 = vld [vmem:[#allocation8 + $0x30] sm:$0xff]
        %v420 = vld [vmem:[#allocation8 + $0x38] sm:$0xff]
        %v421 = vld [vmem:[#allocation8 + $0x40] sm:$0xff]
        %v422 = vld [vmem:[#allocation8 + $0x48] sm:$0xff]
        %v423 = vld [vmem:[#allocation8 + $0x50] sm:$0xff]
        %v424 = vld [vmem:[#allocation8 + $0x58] sm:$0xff]
        %v425 = vld [vmem:[#allocation8 + $0x60] sm:$0xff]
        %v426 = vld [vmem:[#allocation8 + $0x68] sm:$0xff]
        %v427 = vld [vmem:[#allocation8 + $0x70] sm:$0xff]
        %v428 = vld [vmem:[#allocation8 + $0x78] sm:$0xff]
        %v429 = vld [vmem:[#allocation8 + $0x80] sm:$0xff]
        %v430 = vld [vmem:[#allocation8 + $0x88] sm:$0xff]
        %v431 = vld [vmem:[#allocation8 + $0x90] sm:$0xff]
        %v432 = vld [vmem:[#allocation8 + $0x98] sm:$0xff]
        %v433 = vld [vmem:[#allocation8 + $0xa0] sm:$0xff]
        %v434 = vld [vmem:[#allocation8 + $0xa8] sm:$0xff]
        %v435 = vld [vmem:[#allocation8 + $0xb0] sm:$0xff]
        %v436 = vld [vmem:[#allocation8 + $0xb8] sm:$0xff]
        %v437 = vld [vmem:[#allocation8 + $0xc0] sm:$0xff]
        %v438 = vld [vmem:[#allocation8 + $0xc8] sm:$0xff]
        %v439 = vld [vmem:[#allocation8 + $0xd0] sm:$0xff]
        %v440 = vld [vmem:[#allocation8 + $0xd8] sm:$0xff]
        %v441 = vld [vmem:[#allocation8 + $0xe0] sm:$0xff]
        %v442 = vld [vmem:[#allocation8 + $0xe8] sm:$0xff]
        %v443 = vld [vmem:[#allocation8 + $0xf0] sm:$0xff]
        %v444 = vld [vmem:[#allocation8 + $0xf8] sm:$0xff]
        %v445 = vld [vmem:[#allocation8 + $0x100] sm:$0xff]
        %v446 = vld [vmem:[#allocation8 + $0x108] sm:$0xff]
        %v447 = vld [vmem:[#allocation8 + $0x110] sm:$0xff]
        %v448 = vld [vmem:[#allocation8 + $0x118] sm:$0xff]
        %v449 = vld [vmem:[#allocation8 + $0x120] sm:$0xff]
        %v450 = vld [vmem:[#allocation8 + $0x128] sm:$0xff]
        %v451 = vld [vmem:[#allocation8 + $0x130] sm:$0xff]
        %v452 = vld [vmem:[#allocation8 + $0x138] sm:$0xff]
        %v453 = vld [vmem:[#allocation8 + $0x140] sm:$0xff]
        %v454 = vld [vmem:[#allocation8 + $0x148] sm:$0xff]
        %v455 = vld [vmem:[#allocation8 + $0x150] sm:$0xff]
        %v456 = vld [vmem:[#allocation8 + $0x158] sm:$0xff]
        %v457 = vld [vmem:[#allocation8 + $0x160] sm:$0xff]
        %v458 = vld [vmem:[#allocation8 + $0x168] sm:$0xff]
        %v459 = vld [vmem:[#allocation8 + $0x170] sm:$0xff]
        %v460 = vld [vmem:[#allocation8 + $0x178] sm:$0xff]
        %v461 = vld [vmem:[#allocation8 + $0x180] sm:$0xff]
        %v462 = vld [vmem:[#allocation8 + $0x188] sm:$0xff]
        %v463 = vld [vmem:[#allocation8 + $0x190] sm:$0xff]
        %v464 = vld [vmem:[#allocation8 + $0x198] sm:$0xff]
        %v465 = vld [vmem:[#allocation8 + $0x1a0] sm:$0xff]
        %v466 = vld [vmem:[#allocation8 + $0x1a8] sm:$0xff]
        %v467 = vld [vmem:[#allocation8 + $0x1b0] sm:$0xff]
        %v468 = vld [vmem:[#allocation8 + $0x1b8] sm:$0xff]
        %v469 = vld [vmem:[#allocation8 + $0x1c0] sm:$0xff]
        %v470 = vld [vmem:[#allocation8 + $0x1c8] sm:$0xff]
        %v471 = vld [vmem:[#allocation8 + $0x1d0] sm:$0xff]
        %v472 = vld [vmem:[#allocation8 + $0x1d8] sm:$0xff]
        %v473 = vld [vmem:[#allocation8 + $0x1e0] sm:$0xff]
        %v474 = vld [vmem:[#allocation8 + $0x1e8] sm:$0xff]
        %v475 = vld [vmem:[#allocation8 + $0x1f0] sm:$0xff]
        %v476 = vld [vmem:[#allocation8 + $0x1f8] sm:$0xff]
        %v477 = vlaneseq
        %v478 = vand.u32 %v477, 127
        %v479 = vadd.s32 %v478, 128
        %s480 = smul.u32 %s27, 256
        %v481 = vstv %s480
        %v482 = vadd.s32 %v478, %v481
        %v483 = vadd.s32 %v479, %v481
        %v484 = vadd.s32 %v482, 1
        %v485 = vadd.s32 %v483, 1
        %v486 = vcvt.s32.f32 %v484
        %v487 = vcvt.s32.f32 %v485
        %v488 = vmul.f32 %v486, 2.0
        %v489 = vmul.f32 %v487, 2.0
        %v490 = vrcp.pop %v488
        %v491 = vrcp.pop %v489
        %v492 = vadd.f32 %v317, %v365
        %v493 = vadd.f32 %v318, %v366
        %v494 = vadd.f32 %v319, %v367
        %v495 = vadd.f32 %v320, %v368
        %v496 = vadd.f32 %v321, %v369
        %v497 = vadd.f32 %v322, %v370
        %v498 = vadd.f32 %v323, %v371
        %v499 = vadd.f32 %v324, %v372
        %v500 = vadd.f32 %v325, %v373
        %v501 = vadd.f32 %v326, %v374
        %v502 = vadd.f32 %v327, %v375
        %v503 = vadd.f32 %v328, %v376
        %v504 = vadd.f32 %v329, %v377
        %v505 = vadd.f32 %v330, %v378
        %v506 = vadd.f32 %v331, %v379
        %v507 = vadd.f32 %v332, %v380
        %v508 = vadd.f32 %v333, %v381
        %v509 = vadd.f32 %v334, %v382
        %v510 = vadd.f32 %v335, %v383
        %v511 = vadd.f32 %v336, %v384
        %v512 = vadd.f32 %v337, %v385
        %v513 = vadd.f32 %v338, %v386
        %v514 = vadd.f32 %v339, %v387
        %v515 = vadd.f32 %v340, %v388
        %v516 = vadd.f32 %v341, %v389
        %v517 = vadd.f32 %v342, %v390
        %v518 = vadd.f32 %v343, %v391
        %v519 = vadd.f32 %v344, %v392
        %v520 = vadd.f32 %v345, %v393
        %v521 = vadd.f32 %v346, %v394
        %v522 = vadd.f32 %v347, %v395
        %v523 = vadd.f32 %v348, %v396
        %v524 = vadd.f32 %v349, %v397
        %v525 = vadd.f32 %v350, %v398
        %v526 = vadd.f32 %v351, %v399
        %v527 = vadd.f32 %v352, %v400
        %v528 = vadd.f32 %v353, %v401
        %v529 = vadd.f32 %v354, %v402
        %v530 = vadd.f32 %v355, %v403
        %v531 = vadd.f32 %v356, %v404
        %v532 = vadd.f32 %v357, %v405
        %v533 = vadd.f32 %v358, %v406
        %v534 = vadd.f32 %v359, %v407
        %v535 = vadd.f32 %v360, %v408
        %v536 = vadd.f32 %v361, %v409
        %v537 = vadd.f32 %v362, %v410
        %v538 = vadd.f32 %v363, %v411
        %v539 = vadd.f32 %v364, %v412
        %v540 = vld [vmem:[#allocation2] sm:$0xff]
        %v541 = vld [vmem:[#allocation2 + $0x8] sm:$0xff]
        %v542 = vld [vmem:[#allocation2 + $0x10] sm:$0xff]
        %v543 = vld [vmem:[#allocation2 + $0x18] sm:$0xff]
        %v544 = vld [vmem:[#allocation2 + $0x20] sm:$0xff]
        %v545 = vld [vmem:[#allocation2 + $0x28] sm:$0xff]
        %v546 = vld [vmem:[#allocation2 + $0x30] sm:$0xff]
        %v547 = vld [vmem:[#allocation2 + $0x38] sm:$0xff]
        %v548 = vld [vmem:[#allocation2 + $0x40] sm:$0xff]
        %v549 = vld [vmem:[#allocation2 + $0x48] sm:$0xff]
        %v550 = vld [vmem:[#allocation2 + $0x50] sm:$0xff]
        %v551 = vld [vmem:[#allocation2 + $0x58] sm:$0xff]
        %v552 = vld [vmem:[#allocation2 + $0x60] sm:$0xff]
        %v553 = vld [vmem:[#allocation2 + $0x68] sm:$0xff]
        %v554 = vld [vmem:[#allocation2 + $0x70] sm:$0xff]
        %v555 = vld [vmem:[#allocation2 + $0x78] sm:$0xff]
        %v556 = vld [vmem:[#allocation2 + $0x80] sm:$0xff]
        %v557 = vld [vmem:[#allocation2 + $0x88] sm:$0xff]
        %v558 = vld [vmem:[#allocation2 + $0x90] sm:$0xff]
        %v559 = vld [vmem:[#allocation2 + $0x98] sm:$0xff]
        %v560 = vld [vmem:[#allocation2 + $0xa0] sm:$0xff]
        %v561 = vld [vmem:[#allocation2 + $0xa8] sm:$0xff]
        %v562 = vld [vmem:[#allocation2 + $0xb0] sm:$0xff]
        %v563 = vld [vmem:[#allocation2 + $0xb8] sm:$0xff]
        %564 = vmatprep.subr.mxu0 %v414
        %565 = vmatpush1.msra.mxu0 %v413
        %566 = vmatprep.subr.mxu0 %v416
        %567 = vmatpush1.msra.mxu0 %v415
        %568 = vmatprep.subr.mxu0 %v418
        %569 = vmatpush1.msra.mxu0 %v417
        %570 = vmatprep.subr.mxu0 %v420
        %571 = vmatpush1.msra.mxu0 %v419
        %572 = vmatprep.subr.mxu0 %v422
        %573 = vmatpush1.msra.mxu0 %v421
        %574 = vmatprep.subr.mxu0 %v424
        %575 = vmatpush1.msra.mxu0 %v423
        %576 = vmatprep.subr.mxu0 %v426
        %577 = vmatpush1.msra.mxu0 %v425
        %578 = vmatprep.subr.mxu0 %v428
        %579 = vmatpush1.msra.mxu0 %v427
        %580 = vmatprep.subr.mxu0 %v430
        %581 = vmatpush1.msra.mxu0 %v429
        %582 = vmatprep.subr.mxu0 %v432
        %583 = vmatpush1.msra.mxu0 %v431
        %584 = vmatprep.subr.mxu0 %v434
        %585 = vmatpush1.msra.mxu0 %v433
        %586 = vmatprep.subr.mxu0 %v436
        %587 = vmatpush1.msra.mxu0 %v435
        %588 = vmatprep.subr.mxu0 %v438
        %589 = vmatpush1.msra.mxu0 %v437
        %590 = vmatprep.subr.mxu0 %v440
        %591 = vmatpush1.msra.mxu0 %v439
        %592 = vmatprep.subr.mxu0 %v442
        %593 = vmatpush1.msra.mxu0 %v441
        %594 = vmatprep.subr.mxu0 %v444
        %595 = vmatpush1.msra.mxu0 %v443
        %596 = vmatprep.subr.mxu0 %v446
        %597 = vmatpush1.msra.mxu0 %v445
        %598 = vmatprep.subr.mxu0 %v448
        %599 = vmatpush1.msra.mxu0 %v447
        %600 = vmatprep.subr.mxu0 %v450
        %601 = vmatpush1.msra.mxu0 %v449
        %602 = vmatprep.subr.mxu0 %v452
        %603 = vmatpush1.msra.mxu0 %v451
        %604 = vmatprep.subr.mxu0 %v454
        %605 = vmatpush1.msra.mxu0 %v453
        %606 = vmatprep.subr.mxu0 %v456
        %607 = vmatpush1.msra.mxu0 %v455
        %608 = vmatprep.subr.mxu0 %v458
        %609 = vmatpush1.msra.mxu0 %v457
        %610 = vmatprep.subr.mxu0 %v460
        %611 = vmatpush1.msra.mxu0 %v459
        %612 = vmatprep.subr.mxu0 %v462
        %613 = vmatpush1.msra.mxu0 %v461
        %614 = vmatprep.subr.mxu0 %v464
        %615 = vmatpush1.msra.mxu0 %v463
        %616 = vmatprep.subr.mxu0 %v466
        %617 = vmatpush1.msra.mxu0 %v465
        %618 = vmatprep.subr.mxu0 %v468
        %619 = vmatpush1.msra.mxu0 %v467
        %620 = vmatprep.subr.mxu0 %v470
        %621 = vmatpush1.msra.mxu0 %v469
        %622 = vmatprep.subr.mxu0 %v472
        %623 = vmatpush1.msra.mxu0 %v471
        %624 = vmatprep.subr.mxu0 %v474
        %625 = vmatpush1.msra.mxu0 %v473
        %626 = vmatprep.subr.mxu0 %v476
        %627 = vmatpush1.msra.mxu0 %v475
        %628 = vmatprep.mubr.f32.mxu0 %v493
        %629 = vmatmul.mubr.f32.gmra.mrb[0].mxu0 %v492
        %v630 = vpop.f32.mrb[0].mxu0
        %v631 = vadd.f32 0.0, %v630
        %v632 = vpop.f32.mrb[0].mxu0
        %v633 = vadd.f32 0.0, %v632
        %634 = vmatprep.mubr.f32.mxu0 %v495
        %635 = vmatmul.mubr.f32.gmra.mrb[0].mxu0 %v494
        %v636 = vpop.f32.mrb[0].mxu0
        %v637 = vadd.f32 0.0, %v636
        %v638 = vpop.f32.mrb[0].mxu0
        %v639 = vadd.f32 0.0, %v638
        %640 = vmatprep.mubr.f32.mxu0 %v497
        %641 = vmatmul.mubr.f32.gmra.mrb[0].mxu0 %v496
        %v642 = vpop.f32.mrb[0].mxu0
        %v643 = vadd.f32 0.0, %v642
        %v644 = vpop.f32.mrb[0].mxu0
        %v645 = vadd.f32 0.0, %v644
        %646 = vmatprep.mubr.f32.mxu0 %v499
        %647 = vmatmul.mubr.f32.gmra.mrb[0].mxu0 %v498
        %v648 = vpop.f32.mrb[0].mxu0
        %v649 = vadd.f32 0.0, %v648
        %v650 = vpop.f32.mrb[0].mxu0
        %v651 = vadd.f32 0.0, %v650
        %652 = vmatprep.mubr.f32.mxu0 %v501
        %653 = vmatmul.mubr.f32.gmra.mrb[0].mxu0 %v500
        %v654 = vpop.f32.mrb[0].mxu0
        %v655 = vadd.f32 0.0, %v654
        %v656 = vpop.f32.mrb[0].mxu0
        %v657 = vadd.f32 0.0, %v656
        %658 = vmatprep.mubr.f32.mxu0 %v503
        %659 = vmatmul.mubr.f32.gmra.mrb[0].mxu0 %v502
        %v660 = vpop.f32.mrb[0].mxu0
        %v661 = vadd.f32 0.0, %v660
        %v662 = vpop.f32.mrb[0].mxu0
        %v663 = vadd.f32 0.0, %v662
        %664 = vmatprep.mubr.f32.mxu0 %v505
        %665 = vmatmul.mubr.f32.gmra.mrb[0].mxu0 %v504
        %v666 = vpop.f32.mrb[0].mxu0
        %v667 = vadd.f32 0.0, %v666
        %v668 = vpop.f32.mrb[0].mxu0
        %v669 = vadd.f32 0.0, %v668
        %670 = vmatprep.mubr.f32.mxu0 %v507
        %671 = vmatmul.mubr.f32.gmra.mrb[0].mxu0 %v506
        %v672 = vpop.f32.mrb[0].mxu0
        %v673 = vadd.f32 0.0, %v672
        %v674 = vpop.f32.mrb[0].mxu0
        %v675 = vadd.f32 0.0, %v674
        %676 = vmatprep.mubr.f32.mxu0 %v509
        %677 = vmatmul.mubr.f32.gmra.mrb[0].mxu0 %v508
        %v678 = vpop.f32.mrb[0].mxu0
        %v679 = vadd.f32 0.0, %v678
        %v680 = vpop.f32.mrb[0].mxu0
        %v681 = vadd.f32 0.0, %v680
        %682 = vmatprep.mubr.f32.mxu0 %v511
        %683 = vmatmul.mubr.f32.gmra.mrb[0].mxu0 %v510
        %v684 = vpop.f32.mrb[0].mxu0
        %v685 = vadd.f32 0.0, %v684
        %v686 = vpop.f32.mrb[0].mxu0
        %v687 = vadd.f32 0.0, %v686
        %688 = vmatprep.mubr.f32.mxu0 %v513
        %689 = vmatmul.mubr.f32.gmra.mrb[0].mxu0 %v512
        %v690 = vpop.f32.mrb[0].mxu0
        %v691 = vadd.f32 0.0, %v690
        %v692 = vpop.f32.mrb[0].mxu0
        %v693 = vadd.f32 0.0, %v692
        %694 = vmatprep.mubr.f32.mxu0 %v515
        %695 = vmatmul.mubr.f32.gmra.mrb[0].mxu0 %v514
        %v696 = vpop.f32.mrb[0].mxu0
        %v697 = vadd.f32 0.0, %v696
        %v698 = vpop.f32.mrb[0].mxu0
        %v699 = vadd.f32 0.0, %v698
        %700 = vmatprep.mubr.f32.mxu0 %v517
        %701 = vmatmul.mubr.f32.gmra.mrb[0].mxu0 %v516
        %v702 = vpop.f32.mrb[0].mxu0
        %v703 = vadd.f32 0.0, %v702
        %v704 = vpop.f32.mrb[0].mxu0
        %v705 = vadd.f32 0.0, %v704
        %706 = vmatprep.mubr.f32.mxu0 %v519
        %707 = vmatmul.mubr.f32.gmra.mrb[0].mxu0 %v518
        %v708 = vpop.f32.mrb[0].mxu0
        %v709 = vadd.f32 0.0, %v708
        %v710 = vpop.f32.mrb[0].mxu0
        %v711 = vadd.f32 0.0, %v710
        %712 = vmatprep.mubr.f32.mxu0 %v521
        %713 = vmatmul.mubr.f32.gmra.mrb[0].mxu0 %v520
        %v714 = vpop.f32.mrb[0].mxu0
        %v715 = vadd.f32 0.0, %v714
        %v716 = vpop.f32.mrb[0].mxu0
        %v717 = vadd.f32 0.0, %v716
        %718 = vmatprep.mubr.f32.mxu0 %v523
        %719 = vmatmul.mubr.f32.gmra.mrb[0].mxu0 %v522
        %v720 = vpop.f32.mrb[0].mxu0
        %v721 = vadd.f32 0.0, %v720
        %v722 = vpop.f32.mrb[0].mxu0
        %v723 = vadd.f32 0.0, %v722
        %724 = vmatprep.mubr.f32.mxu0 %v525
        %725 = vmatmul.mubr.f32.gmra.mrb[0].mxu0 %v524
        %v726 = vpop.f32.mrb[0].mxu0
        %v727 = vadd.f32 0.0, %v726
        %v728 = vpop.f32.mrb[0].mxu0
        %v729 = vadd.f32 0.0, %v728
        %730 = vmatprep.mubr.f32.mxu0 %v527
        %731 = vmatmul.mubr.f32.gmra.mrb[0].mxu0 %v526
        %v732 = vpop.f32.mrb[0].mxu0
        %v733 = vadd.f32 0.0, %v732
        %v734 = vpop.f32.mrb[0].mxu0
        %v735 = vadd.f32 0.0, %v734
        %736 = vmatprep.mubr.f32.mxu0 %v529
        %737 = vmatmul.mubr.f32.gmra.mrb[0].mxu0 %v528
        %v738 = vpop.f32.mrb[0].mxu0
        %v739 = vadd.f32 0.0, %v738
        %v740 = vpop.f32.mrb[0].mxu0
        %v741 = vadd.f32 0.0, %v740
        %742 = vmatprep.mubr.f32.mxu0 %v531
        %743 = vmatmul.mubr.f32.gmra.mrb[0].mxu0 %v530
        %v744 = vpop.f32.mrb[0].mxu0
        %v745 = vadd.f32 0.0, %v744
        %v746 = vpop.f32.mrb[0].mxu0
        %v747 = vadd.f32 0.0, %v746
        %748 = vmatprep.mubr.f32.mxu0 %v533
        %749 = vmatmul.mubr.f32.gmra.mrb[0].mxu0 %v532
        %v750 = vpop.f32.mrb[0].mxu0
        %v751 = vadd.f32 0.0, %v750
        %v752 = vpop.f32.mrb[0].mxu0
        %v753 = vadd.f32 0.0, %v752
        %754 = vmatprep.mubr.f32.mxu0 %v535
        %755 = vmatmul.mubr.f32.gmra.mrb[0].mxu0 %v534
        %v756 = vpop.f32.mrb[0].mxu0
        %v757 = vadd.f32 0.0, %v756
        %v758 = vpop.f32.mrb[0].mxu0
        %v759 = vadd.f32 0.0, %v758
        %760 = vmatprep.mubr.f32.mxu0 %v537
        %761 = vmatmul.mubr.f32.gmra.mrb[0].mxu0 %v536
        %v762 = vpop.f32.mrb[0].mxu0
        %v763 = vadd.f32 0.0, %v762
        %v764 = vpop.f32.mrb[0].mxu0
        %v765 = vadd.f32 0.0, %v764
        %766 = vmatprep.mubr.f32.mxu0 %v539
        %767 = vmatmul.mubr.f32.gmra.mrb[0].mxu0 %v538
        %v768 = vpop.f32.mrb[0].mxu0
        %v769 = vadd.f32 0.0, %v768
        %v770 = vpop.f32.mrb[0].mxu0
        %v771 = vadd.f32 0.0, %v770
        %772 = vdwg.mxu0
        %774 = vset.pattern.permute.xlu0 0
        %775 = vperm.xlu0 %774, %v540
        %v776 = vpop.permute.xlu0 %775
        %779 = vset.pattern.permute.xlu0 0
        %780 = vperm.xlu0 %779, %v541
        %v781 = vpop.permute.xlu0 %780
        %784 = vset.pattern.permute.xlu0 0
        %785 = vperm.xlu0 %784, %v542
        %v786 = vpop.permute.xlu0 %785
        %789 = vset.pattern.permute.xlu0 0
        %790 = vperm.xlu0 %789, %v543
        %v791 = vpop.permute.xlu0 %790
        %794 = vset.pattern.permute.xlu0 0
        %795 = vperm.xlu0 %794, %v544
        %v796 = vpop.permute.xlu0 %795
        %799 = vset.pattern.permute.xlu0 0
        %800 = vperm.xlu0 %799, %v545
        %v801 = vpop.permute.xlu0 %800
        %804 = vset.pattern.permute.xlu0 0
        %805 = vperm.xlu0 %804, %v546
        %v806 = vpop.permute.xlu0 %805
        %809 = vset.pattern.permute.xlu0 0
        %810 = vperm.xlu0 %809, %v547
        %v811 = vpop.permute.xlu0 %810
        %814 = vset.pattern.permute.xlu0 0
        %815 = vperm.xlu0 %814, %v548
        %v816 = vpop.permute.xlu0 %815
        %819 = vset.pattern.permute.xlu0 0
        %820 = vperm.xlu0 %819, %v549
        %v821 = vpop.permute.xlu0 %820
        %824 = vset.pattern.permute.xlu0 0
        %825 = vperm.xlu0 %824, %v550
        %v826 = vpop.permute.xlu0 %825
        %829 = vset.pattern.permute.xlu0 0
        %830 = vperm.xlu0 %829, %v551
        %v831 = vpop.permute.xlu0 %830
        %834 = vset.pattern.permute.xlu0 0
        %835 = vperm.xlu0 %834, %v552
        %v836 = vpop.permute.xlu0 %835
        %839 = vset.pattern.permute.xlu0 0
        %840 = vperm.xlu0 %839, %v553
        %v841 = vpop.permute.xlu0 %840
        %844 = vset.pattern.permute.xlu0 0
        %845 = vperm.xlu0 %844, %v554
        %v846 = vpop.permute.xlu0 %845
        %849 = vset.pattern.permute.xlu0 0
        %850 = vperm.xlu0 %849, %v555
        %v851 = vpop.permute.xlu0 %850
        %854 = vset.pattern.permute.xlu0 0
        %855 = vperm.xlu0 %854, %v556
        %v856 = vpop.permute.xlu0 %855
        %859 = vset.pattern.permute.xlu0 0
        %860 = vperm.xlu0 %859, %v557
        %v861 = vpop.permute.xlu0 %860
        %864 = vset.pattern.permute.xlu0 0
        %865 = vperm.xlu0 %864, %v558
        %v866 = vpop.permute.xlu0 %865
        %869 = vset.pattern.permute.xlu0 0
        %870 = vperm.xlu0 %869, %v559
        %v871 = vpop.permute.xlu0 %870
        %874 = vset.pattern.permute.xlu0 0
        %875 = vperm.xlu0 %874, %v560
        %v876 = vpop.permute.xlu0 %875
        %879 = vset.pattern.permute.xlu0 0
        %880 = vperm.xlu0 %879, %v561
        %v881 = vpop.permute.xlu0 %880
        %884 = vset.pattern.permute.xlu0 0
        %885 = vperm.xlu0 %884, %v562
        %v886 = vpop.permute.xlu0 %885
        %889 = vset.pattern.permute.xlu0 0
        %890 = vperm.xlu0 %889, %v563
        %v891 = vpop.permute.xlu0 %890
        %v893 = vadd.f32 %v776, %v631
        %v894 = vadd.f32 %v776, %v633
        %v895 = vadd.f32 %v781, %v637
        %v896 = vadd.f32 %v781, %v639
        %v897 = vadd.f32 %v786, %v643
        %v898 = vadd.f32 %v786, %v645
        %v899 = vadd.f32 %v791, %v649
        %v900 = vadd.f32 %v791, %v651
        %v901 = vadd.f32 %v796, %v655
        %v902 = vadd.f32 %v796, %v657
        %v903 = vadd.f32 %v801, %v661
        %v904 = vadd.f32 %v801, %v663
        %v905 = vadd.f32 %v806, %v667
        %v906 = vadd.f32 %v806, %v669
        %v907 = vadd.f32 %v811, %v673
        %v908 = vadd.f32 %v811, %v675
        %v909 = vadd.f32 %v816, %v679
        %v910 = vadd.f32 %v816, %v681
        %v911 = vadd.f32 %v821, %v685
        %v912 = vadd.f32 %v821, %v687
        %v913 = vadd.f32 %v826, %v691
        %v914 = vadd.f32 %v826, %v693
        %v915 = vadd.f32 %v831, %v697
        %v916 = vadd.f32 %v831, %v699
        %v917 = vadd.f32 %v836, %v703
        %v918 = vadd.f32 %v836, %v705
        %v919 = vadd.f32 %v841, %v709
        %v920 = vadd.f32 %v841, %v711
        %v921 = vadd.f32 %v846, %v715
        %v922 = vadd.f32 %v846, %v717
        %v923 = vadd.f32 %v851, %v721
        %v924 = vadd.f32 %v851, %v723
        %v925 = vadd.f32 %v856, %v727
        %v926 = vadd.f32 %v856, %v729
        %v927 = vadd.f32 %v861, %v733
        %v928 = vadd.f32 %v861, %v735
        %v929 = vadd.f32 %v866, %v739
        %v930 = vadd.f32 %v866, %v741
        %v931 = vadd.f32 %v871, %v745
        %v932 = vadd.f32 %v871, %v747
        %v933 = vadd.f32 %v876, %v751
        %v934 = vadd.f32 %v876, %v753
        %v935 = vadd.f32 %v881, %v757
        %v936 = vadd.f32 %v881, %v759
        %v937 = vadd.f32 %v886, %v763
        %v938 = vadd.f32 %v886, %v765
        %v939 = vadd.f32 %v891, %v769
        %v940 = vadd.f32 %v891, %v771
        %v941 = vmul.f32 %v893, %v490
        %v942 = vmul.f32 %v894, %v491
        %v943 = vmul.f32 %v895, %v490
        %v944 = vmul.f32 %v896, %v491
        %v945 = vmul.f32 %v897, %v490
        %v946 = vmul.f32 %v898, %v491
        %v947 = vmul.f32 %v899, %v490
        %v948 = vmul.f32 %v900, %v491
        %v949 = vmul.f32 %v901, %v490
        %v950 = vmul.f32 %v902, %v491
        %v951 = vmul.f32 %v903, %v490
        %v952 = vmul.f32 %v904, %v491
        %v953 = vmul.f32 %v905, %v490
        %v954 = vmul.f32 %v906, %v491
        %v955 = vmul.f32 %v907, %v490
        %v956 = vmul.f32 %v908, %v491
        %v957 = vmul.f32 %v909, %v490
        %v958 = vmul.f32 %v910, %v491
        %v959 = vmul.f32 %v911, %v490
        %v960 = vmul.f32 %v912, %v491
        %v961 = vmul.f32 %v913, %v490
        %v962 = vmul.f32 %v914, %v491
        %v963 = vmul.f32 %v915, %v490
        %v964 = vmul.f32 %v916, %v491
        %v965 = vmul.f32 %v917, %v490
        %v966 = vmul.f32 %v918, %v491
        %v967 = vmul.f32 %v919, %v490
        %v968 = vmul.f32 %v920, %v491
        %v969 = vmul.f32 %v921, %v490
        %v970 = vmul.f32 %v922, %v491
        %v971 = vmul.f32 %v923, %v490
        %v972 = vmul.f32 %v924, %v491
        %v973 = vmul.f32 %v925, %v490
        %v974 = vmul.f32 %v926, %v491
        %v975 = vmul.f32 %v927, %v490
        %v976 = vmul.f32 %v928, %v491
        %v977 = vmul.f32 %v929, %v490
        %v978 = vmul.f32 %v930, %v491
        %v979 = vmul.f32 %v931, %v490
        %v980 = vmul.f32 %v932, %v491
        %v981 = vmul.f32 %v933, %v490
        %v982 = vmul.f32 %v934, %v491
        %v983 = vmul.f32 %v935, %v490
        %v984 = vmul.f32 %v936, %v491
        %v985 = vmul.f32 %v937, %v490
        %v986 = vmul.f32 %v938, %v491
        %v987 = vmul.f32 %v939, %v490
        %v988 = vmul.f32 %v940, %v491
        %v989 = vsub.f32 %v317, %v941
        %v990 = vsub.f32 %v318, %v942
        %v991 = vsub.f32 %v319, %v943
        %v992 = vsub.f32 %v320, %v944
        %v993 = vsub.f32 %v321, %v945
        %v994 = vsub.f32 %v322, %v946
        %v995 = vsub.f32 %v323, %v947
        %v996 = vsub.f32 %v324, %v948
        %v997 = vsub.f32 %v325, %v949
        %v998 = vsub.f32 %v326, %v950
        %v999 = vsub.f32 %v327, %v951
        %v1000 = vsub.f32 %v328, %v952
        %v1001 = vsub.f32 %v329, %v953
        %v1002 = vsub.f32 %v330, %v954
        %v1003 = vsub.f32 %v331, %v955
        %v1004 = vsub.f32 %v332, %v956
        %v1005 = vsub.f32 %v333, %v957
        %v1006 = vsub.f32 %v334, %v958
        %v1007 = vsub.f32 %v335, %v959
        %v1008 = vsub.f32 %v336, %v960
        %v1009 = vsub.f32 %v337, %v961
        %v1010 = vsub.f32 %v338, %v962
        %v1011 = vsub.f32 %v339, %v963
        %v1012 = vsub.f32 %v340, %v964
        %v1013 = vsub.f32 %v341, %v965
        %v1014 = vsub.f32 %v342, %v966
        %v1015 = vsub.f32 %v343, %v967
        %v1016 = vsub.f32 %v344, %v968
        %v1017 = vsub.f32 %v345, %v969
        %v1018 = vsub.f32 %v346, %v970
        %v1019 = vsub.f32 %v347, %v971
        %v1020 = vsub.f32 %v348, %v972
        %v1021 = vsub.f32 %v349, %v973
        %v1022 = vsub.f32 %v350, %v974
        %v1023 = vsub.f32 %v351, %v975
        %v1024 = vsub.f32 %v352, %v976
        %v1025 = vsub.f32 %v353, %v977
        %v1026 = vsub.f32 %v354, %v978
        %v1027 = vsub.f32 %v355, %v979
        %v1028 = vsub.f32 %v356, %v980
        %v1029 = vsub.f32 %v357, %v981
        %v1030 = vsub.f32 %v358, %v982
        %v1031 = vsub.f32 %v359, %v983
        %v1032 = vsub.f32 %v360, %v984
        %v1033 = vsub.f32 %v361, %v985
        %v1034 = vsub.f32 %v362, %v986
        %v1035 = vsub.f32 %v363, %v987
        %v1036 = vsub.f32 %v364, %v988
        %v1037 = vsub.f32 %v365, %v941
        %v1038 = vsub.f32 %v366, %v942
        %v1039 = vsub.f32 %v367, %v943
        %v1040 = vsub.f32 %v368, %v944
        %v1041 = vsub.f32 %v369, %v945
        %v1042 = vsub.f32 %v370, %v946
        %v1043 = vsub.f32 %v371, %v947
        %v1044 = vsub.f32 %v372, %v948
        %v1045 = vsub.f32 %v373, %v949
        %v1046 = vsub.f32 %v374, %v950
        %v1047 = vsub.f32 %v375, %v951
        %v1048 = vsub.f32 %v376, %v952
        %v1049 = vsub.f32 %v377, %v953
        %v1050 = vsub.f32 %v378, %v954
        %v1051 = vsub.f32 %v379, %v955
        %v1052 = vsub.f32 %v380, %v956
        %v1053 = vsub.f32 %v381, %v957
        %v1054 = vsub.f32 %v382, %v958
        %v1055 = vsub.f32 %v383, %v959
        %v1056 = vsub.f32 %v384, %v960
        %v1057 = vsub.f32 %v385, %v961
        %v1058 = vsub.f32 %v386, %v962
        %v1059 = vsub.f32 %v387, %v963
        %v1060 = vsub.f32 %v388, %v964
        %v1061 = vsub.f32 %v389, %v965
        %v1062 = vsub.f32 %v390, %v966
        %v1063 = vsub.f32 %v391, %v967
        %v1064 = vsub.f32 %v392, %v968
        %v1065 = vsub.f32 %v393, %v969
        %v1066 = vsub.f32 %v394, %v970
        %v1067 = vsub.f32 %v395, %v971
        %v1068 = vsub.f32 %v396, %v972
        %v1069 = vsub.f32 %v397, %v973
        %v1070 = vsub.f32 %v398, %v974
        %v1071 = vsub.f32 %v399, %v975
        %v1072 = vsub.f32 %v400, %v976
        %v1073 = vsub.f32 %v401, %v977
        %v1074 = vsub.f32 %v402, %v978
        %v1075 = vsub.f32 %v403, %v979
        %v1076 = vsub.f32 %v404, %v980
        %v1077 = vsub.f32 %v405, %v981
        %v1078 = vsub.f32 %v406, %v982
        %v1079 = vsub.f32 %v407, %v983
        %v1080 = vsub.f32 %v408, %v984
        %v1081 = vsub.f32 %v409, %v985
        %v1082 = vsub.f32 %v410, %v986
        %v1083 = vsub.f32 %v411, %v987
        %v1084 = vsub.f32 %v412, %v988
        %v1085 = vmul.f32 %v989, %v989
        %v1086 = vmul.f32 %v990, %v990
        %v1087 = vmul.f32 %v991, %v991
        %v1088 = vmul.f32 %v992, %v992
        %v1089 = vmul.f32 %v993, %v993
        %v1090 = vmul.f32 %v994, %v994
        %v1091 = vmul.f32 %v995, %v995
        %v1092 = vmul.f32 %v996, %v996
        %v1093 = vmul.f32 %v997, %v997
        %v1094 = vmul.f32 %v998, %v998
        %v1095 = vmul.f32 %v999, %v999
        %v1096 = vmul.f32 %v1000, %v1000
        %v1097 = vmul.f32 %v1001, %v1001
        %v1098 = vmul.f32 %v1002, %v1002
        %v1099 = vmul.f32 %v1003, %v1003
        %v1100 = vmul.f32 %v1004, %v1004
        %v1101 = vmul.f32 %v1005, %v1005
        %v1102 = vmul.f32 %v1006, %v1006
        %v1103 = vmul.f32 %v1007, %v1007
        %v1104 = vmul.f32 %v1008, %v1008
        %v1105 = vmul.f32 %v1009, %v1009
        %v1106 = vmul.f32 %v1010, %v1010
        %v1107 = vmul.f32 %v1011, %v1011
        %v1108 = vmul.f32 %v1012, %v1012
        %v1109 = vmul.f32 %v1013, %v1013
        %v1110 = vmul.f32 %v1014, %v1014
        %v1111 = vmul.f32 %v1015, %v1015
        %v1112 = vmul.f32 %v1016, %v1016
        %v1113 = vmul.f32 %v1017, %v1017
        %v1114 = vmul.f32 %v1018, %v1018
        %v1115 = vmul.f32 %v1019, %v1019
        %v1116 = vmul.f32 %v1020, %v1020
        %v1117 = vmul.f32 %v1021, %v1021
        %v1118 = vmul.f32 %v1022, %v1022
        %v1119 = vmul.f32 %v1023, %v1023
        %v1120 = vmul.f32 %v1024, %v1024
        %v1121 = vmul.f32 %v1025, %v1025
        %v1122 = vmul.f32 %v1026, %v1026
        %v1123 = vmul.f32 %v1027, %v1027
        %v1124 = vmul.f32 %v1028, %v1028
        %v1125 = vmul.f32 %v1029, %v1029
        %v1126 = vmul.f32 %v1030, %v1030
        %v1127 = vmul.f32 %v1031, %v1031
        %v1128 = vmul.f32 %v1032, %v1032
        %v1129 = vmul.f32 %v1033, %v1033
        %v1130 = vmul.f32 %v1034, %v1034
        %v1131 = vmul.f32 %v1035, %v1035
        %v1132 = vmul.f32 %v1036, %v1036
        %v1133 = vmul.f32 %v1037, %v1037
        %v1134 = vmul.f32 %v1038, %v1038
        %v1135 = vmul.f32 %v1039, %v1039
        %v1136 = vmul.f32 %v1040, %v1040
        %v1137 = vmul.f32 %v1041, %v1041
        %v1138 = vmul.f32 %v1042, %v1042
        %v1139 = vmul.f32 %v1043, %v1043
        %v1140 = vmul.f32 %v1044, %v1044
        %v1141 = vmul.f32 %v1045, %v1045
        %v1142 = vmul.f32 %v1046, %v1046
        %v1143 = vmul.f32 %v1047, %v1047
        %v1144 = vmul.f32 %v1048, %v1048
        %v1145 = vmul.f32 %v1049, %v1049
        %v1146 = vmul.f32 %v1050, %v1050
        %v1147 = vmul.f32 %v1051, %v1051
        %v1148 = vmul.f32 %v1052, %v1052
        %v1149 = vmul.f32 %v1053, %v1053
        %v1150 = vmul.f32 %v1054, %v1054
        %v1151 = vmul.f32 %v1055, %v1055
        %v1152 = vmul.f32 %v1056, %v1056
        %v1153 = vmul.f32 %v1057, %v1057
        %v1154 = vmul.f32 %v1058, %v1058
        %v1155 = vmul.f32 %v1059, %v1059
        %v1156 = vmul.f32 %v1060, %v1060
        %v1157 = vmul.f32 %v1061, %v1061
        %v1158 = vmul.f32 %v1062, %v1062
        %v1159 = vmul.f32 %v1063, %v1063
        %v1160 = vmul.f32 %v1064, %v1064
        %v1161 = vmul.f32 %v1065, %v1065
        %v1162 = vmul.f32 %v1066, %v1066
        %v1163 = vmul.f32 %v1067, %v1067
        %v1164 = vmul.f32 %v1068, %v1068
        %v1165 = vmul.f32 %v1069, %v1069
        %v1166 = vmul.f32 %v1070, %v1070
        %v1167 = vmul.f32 %v1071, %v1071
        %v1168 = vmul.f32 %v1072, %v1072
        %v1169 = vmul.f32 %v1073, %v1073
        %v1170 = vmul.f32 %v1074, %v1074
        %v1171 = vmul.f32 %v1075, %v1075
        %v1172 = vmul.f32 %v1076, %v1076
        %v1173 = vmul.f32 %v1077, %v1077
        %v1174 = vmul.f32 %v1078, %v1078
        %v1175 = vmul.f32 %v1079, %v1079
        %v1176 = vmul.f32 %v1080, %v1080
        %v1177 = vmul.f32 %v1081, %v1081
        %v1178 = vmul.f32 %v1082, %v1082
        %v1179 = vmul.f32 %v1083, %v1083
        %v1180 = vmul.f32 %v1084, %v1084
        %v1181 = vadd.f32 %v1085, %v1133
        %v1182 = vadd.f32 %v1086, %v1134
        %v1183 = vadd.f32 %v1087, %v1135
        %v1184 = vadd.f32 %v1088, %v1136
        %v1185 = vadd.f32 %v1089, %v1137
        %v1186 = vadd.f32 %v1090, %v1138
        %v1187 = vadd.f32 %v1091, %v1139
        %v1188 = vadd.f32 %v1092, %v1140
        %v1189 = vadd.f32 %v1093, %v1141
        %v1190 = vadd.f32 %v1094, %v1142
        %v1191 = vadd.f32 %v1095, %v1143
        %v1192 = vadd.f32 %v1096, %v1144
        %v1193 = vadd.f32 %v1097, %v1145
        %v1194 = vadd.f32 %v1098, %v1146
        %v1195 = vadd.f32 %v1099, %v1147
        %v1196 = vadd.f32 %v1100, %v1148
        %v1197 = vadd.f32 %v1101, %v1149
        %v1198 = vadd.f32 %v1102, %v1150
        %v1199 = vadd.f32 %v1103, %v1151
        %v1200 = vadd.f32 %v1104, %v1152
        %v1201 = vadd.f32 %v1105, %v1153
        %v1202 = vadd.f32 %v1106, %v1154
        %v1203 = vadd.f32 %v1107, %v1155
        %v1204 = vadd.f32 %v1108, %v1156
        %v1205 = vadd.f32 %v1109, %v1157
        %v1206 = vadd.f32 %v1110, %v1158
        %v1207 = vadd.f32 %v1111, %v1159
        %v1208 = vadd.f32 %v1112, %v1160
        %v1209 = vadd.f32 %v1113, %v1161
        %v1210 = vadd.f32 %v1114, %v1162
        %v1211 = vadd.f32 %v1115, %v1163
        %v1212 = vadd.f32 %v1116, %v1164
        %v1213 = vadd.f32 %v1117, %v1165
        %v1214 = vadd.f32 %v1118, %v1166
        %v1215 = vadd.f32 %v1119, %v1167
        %v1216 = vadd.f32 %v1120, %v1168
        %v1217 = vadd.f32 %v1121, %v1169
        %v1218 = vadd.f32 %v1122, %v1170
        %v1219 = vadd.f32 %v1123, %v1171
        %v1220 = vadd.f32 %v1124, %v1172
        %v1221 = vadd.f32 %v1125, %v1173
        %v1222 = vadd.f32 %v1126, %v1174
        %v1223 = vadd.f32 %v1127, %v1175
        %v1224 = vadd.f32 %v1128, %v1176
        %v1225 = vadd.f32 %v1129, %v1177
        %v1226 = vadd.f32 %v1130, %v1178
        %v1227 = vadd.f32 %v1131, %v1179
        %v1228 = vadd.f32 %v1132, %v1180
        %v1229 = vld [vmem:[#allocation3] sm:$0xff]
        %v1230 = vld [vmem:[#allocation3 + $0x8] sm:$0xff]
        %v1231 = vld [vmem:[#allocation3 + $0x10] sm:$0xff]
        %v1232 = vld [vmem:[#allocation3 + $0x18] sm:$0xff]
        %v1233 = vld [vmem:[#allocation3 + $0x20] sm:$0xff]
        %v1234 = vld [vmem:[#allocation3 + $0x28] sm:$0xff]
        %v1235 = vld [vmem:[#allocation3 + $0x30] sm:$0xff]
        %v1236 = vld [vmem:[#allocation3 + $0x38] sm:$0xff]
        %v1237 = vld [vmem:[#allocation3 + $0x40] sm:$0xff]
        %v1238 = vld [vmem:[#allocation3 + $0x48] sm:$0xff]
        %v1239 = vld [vmem:[#allocation3 + $0x50] sm:$0xff]
        %v1240 = vld [vmem:[#allocation3 + $0x58] sm:$0xff]
        %v1241 = vld [vmem:[#allocation3 + $0x60] sm:$0xff]
        %v1242 = vld [vmem:[#allocation3 + $0x68] sm:$0xff]
        %v1243 = vld [vmem:[#allocation3 + $0x70] sm:$0xff]
        %v1244 = vld [vmem:[#allocation3 + $0x78] sm:$0xff]
        %v1245 = vld [vmem:[#allocation3 + $0x80] sm:$0xff]
        %v1246 = vld [vmem:[#allocation3 + $0x88] sm:$0xff]
        %v1247 = vld [vmem:[#allocation3 + $0x90] sm:$0xff]
        %v1248 = vld [vmem:[#allocation3 + $0x98] sm:$0xff]
        %v1249 = vld [vmem:[#allocation3 + $0xa0] sm:$0xff]
        %v1250 = vld [vmem:[#allocation3 + $0xa8] sm:$0xff]
        %v1251 = vld [vmem:[#allocation3 + $0xb0] sm:$0xff]
        %v1252 = vld [vmem:[#allocation3 + $0xb8] sm:$0xff]
        %1253 = vmatprep.subr.mxu0 %v414
        %1254 = vmatpush1.msra.mxu0 %v413
        %1255 = vmatprep.subr.mxu0 %v416
        %1256 = vmatpush1.msra.mxu0 %v415
        %1257 = vmatprep.subr.mxu0 %v418
        %1258 = vmatpush1.msra.mxu0 %v417
        %1259 = vmatprep.subr.mxu0 %v420
        %1260 = vmatpush1.msra.mxu0 %v419
        %1261 = vmatprep.subr.mxu0 %v422
        %1262 = vmatpush1.msra.mxu0 %v421
        %1263 = vmatprep.subr.mxu0 %v424
        %1264 = vmatpush1.msra.mxu0 %v423
        %1265 = vmatprep.subr.mxu0 %v426
        %1266 = vmatpush1.msra.mxu0 %v425
        %1267 = vmatprep.subr.mxu0 %v428
        %1268 = vmatpush1.msra.mxu0 %v427
        %1269 = vmatprep.subr.mxu0 %v430
        %1270 = vmatpush1.msra.mxu0 %v429
        %1271 = vmatprep.subr.mxu0 %v432
        %1272 = vmatpush1.msra.mxu0 %v431
        %1273 = vmatprep.subr.mxu0 %v434
        %1274 = vmatpush1.msra.mxu0 %v433
        %1275 = vmatprep.subr.mxu0 %v436
        %1276 = vmatpush1.msra.mxu0 %v435
        %1277 = vmatprep.subr.mxu0 %v438
        %1278 = vmatpush1.msra.mxu0 %v437
        %1279 = vmatprep.subr.mxu0 %v440
        %1280 = vmatpush1.msra.mxu0 %v439
        %1281 = vmatprep.subr.mxu0 %v442
        %1282 = vmatpush1.msra.mxu0 %v441
        %1283 = vmatprep.subr.mxu0 %v444
        %1284 = vmatpush1.msra.mxu0 %v443
        %1285 = vmatprep.subr.mxu0 %v446
        %1286 = vmatpush1.msra.mxu0 %v445
        %1287 = vmatprep.subr.mxu0 %v448
        %1288 = vmatpush1.msra.mxu0 %v447
        %1289 = vmatprep.subr.mxu0 %v450
        %1290 = vmatpush1.msra.mxu0 %v449
        %1291 = vmatprep.subr.mxu0 %v452
        %1292 = vmatpush1.msra.mxu0 %v451
        %1293 = vmatprep.subr.mxu0 %v454
        %1294 = vmatpush1.msra.mxu0 %v453
        %1295 = vmatprep.subr.mxu0 %v456
        %1296 = vmatpush1.msra.mxu0 %v455
        %1297 = vmatprep.subr.mxu0 %v458
        %1298 = vmatpush1.msra.mxu0 %v457
        %1299 = vmatprep.subr.mxu0 %v460
        %1300 = vmatpush1.msra.mxu0 %v459
        %1301 = vmatprep.subr.mxu0 %v462
        %1302 = vmatpush1.msra.mxu0 %v461
        %1303 = vmatprep.subr.mxu0 %v464
        %1304 = vmatpush1.msra.mxu0 %v463
        %1305 = vmatprep.subr.mxu0 %v466
        %1306 = vmatpush1.msra.mxu0 %v465
        %1307 = vmatprep.subr.mxu0 %v468
        %1308 = vmatpush1.msra.mxu0 %v467
        %1309 = vmatprep.subr.mxu0 %v470
        %1310 = vmatpush1.msra.mxu0 %v469
        %1311 = vmatprep.subr.mxu0 %v472
        %1312 = vmatpush1.msra.mxu0 %v471
        %1313 = vmatprep.subr.mxu0 %v474
        %1314 = vmatpush1.msra.mxu0 %v473
        %1315 = vmatprep.subr.mxu0 %v476
        %1316 = vmatpush1.msra.mxu0 %v475
        %1317 = vmatprep.mubr.f32.mxu0 %v1182
        %1318 = vmatmul.mubr.f32.gmra.mrb[0].mxu0 %v1181
        %v1319 = vpop.f32.mrb[0].mxu0
        %v1320 = vadd.f32 0.0, %v1319
        %v1321 = vpop.f32.mrb[0].mxu0
        %v1322 = vadd.f32 0.0, %v1321
        %1323 = vmatprep.mubr.f32.mxu0 %v1184
        %1324 = vmatmul.mubr.f32.gmra.mrb[0].mxu0 %v1183
        %v1325 = vpop.f32.mrb[0].mxu0
        %v1326 = vadd.f32 0.0, %v1325
        %v1327 = vpop.f32.mrb[0].mxu0
        %v1328 = vadd.f32 0.0, %v1327
        %1329 = vmatprep.mubr.f32.mxu0 %v1186
        %1330 = vmatmul.mubr.f32.gmra.mrb[0].mxu0 %v1185
        %v1331 = vpop.f32.mrb[0].mxu0
        %v1332 = vadd.f32 0.0, %v1331
        %v1333 = vpop.f32.mrb[0].mxu0
        %v1334 = vadd.f32 0.0, %v1333
        %1335 = vmatprep.mubr.f32.mxu0 %v1188
        %1336 = vmatmul.mubr.f32.gmra.mrb[0].mxu0 %v1187
        %v1337 = vpop.f32.mrb[0].mxu0
        %v1338 = vadd.f32 0.0, %v1337
        %v1339 = vpop.f32.mrb[0].mxu0
        %v1340 = vadd.f32 0.0, %v1339
        %1341 = vmatprep.mubr.f32.mxu0 %v1190
        %1342 = vmatmul.mubr.f32.gmra.mrb[0].mxu0 %v1189
        %v1343 = vpop.f32.mrb[0].mxu0
        %v1344 = vadd.f32 0.0, %v1343
        %v1345 = vpop.f32.mrb[0].mxu0
        %v1346 = vadd.f32 0.0, %v1345
        %1347 = vmatprep.mubr.f32.mxu0 %v1192
        %1348 = vmatmul.mubr.f32.gmra.mrb[0].mxu0 %v1191
        %v1349 = vpop.f32.mrb[0].mxu0
        %v1350 = vadd.f32 0.0, %v1349
        %v1351 = vpop.f32.mrb[0].mxu0
        %v1352 = vadd.f32 0.0, %v1351
        %1353 = vmatprep.mubr.f32.mxu0 %v1194
        %1354 = vmatmul.mubr.f32.gmra.mrb[0].mxu0 %v1193
        %v1355 = vpop.f32.mrb[0].mxu0
        %v1356 = vadd.f32 0.0, %v1355
        %v1357 = vpop.f32.mrb[0].mxu0
        %v1358 = vadd.f32 0.0, %v1357
        %1359 = vmatprep.mubr.f32.mxu0 %v1196
        %1360 = vmatmul.mubr.f32.gmra.mrb[0].mxu0 %v1195
        %v1361 = vpop.f32.mrb[0].mxu0
        %v1362 = vadd.f32 0.0, %v1361
        %v1363 = vpop.f32.mrb[0].mxu0
        %v1364 = vadd.f32 0.0, %v1363
        %1365 = vmatprep.mubr.f32.mxu0 %v1198
        %1366 = vmatmul.mubr.f32.gmra.mrb[0].mxu0 %v1197
        %v1367 = vpop.f32.mrb[0].mxu0
        %v1368 = vadd.f32 0.0, %v1367
        %v1369 = vpop.f32.mrb[0].mxu0
        %v1370 = vadd.f32 0.0, %v1369
        %1371 = vmatprep.mubr.f32.mxu0 %v1200
        %1372 = vmatmul.mubr.f32.gmra.mrb[0].mxu0 %v1199
        %v1373 = vpop.f32.mrb[0].mxu0
        %v1374 = vadd.f32 0.0, %v1373
        %v1375 = vpop.f32.mrb[0].mxu0
        %v1376 = vadd.f32 0.0, %v1375
        %1377 = vmatprep.mubr.f32.mxu0 %v1202
        %1378 = vmatmul.mubr.f32.gmra.mrb[0].mxu0 %v1201
        %v1379 = vpop.f32.mrb[0].mxu0
        %v1380 = vadd.f32 0.0, %v1379
        %v1381 = vpop.f32.mrb[0].mxu0
        %v1382 = vadd.f32 0.0, %v1381
        %1383 = vmatprep.mubr.f32.mxu0 %v1204
        %1384 = vmatmul.mubr.f32.gmra.mrb[0].mxu0 %v1203
        %v1385 = vpop.f32.mrb[0].mxu0
        %v1386 = vadd.f32 0.0, %v1385
        %v1387 = vpop.f32.mrb[0].mxu0
        %v1388 = vadd.f32 0.0, %v1387
        %1389 = vmatprep.mubr.f32.mxu0 %v1206
        %1390 = vmatmul.mubr.f32.gmra.mrb[0].mxu0 %v1205
        %v1391 = vpop.f32.mrb[0].mxu0
        %v1392 = vadd.f32 0.0, %v1391
        %v1393 = vpop.f32.mrb[0].mxu0
        %v1394 = vadd.f32 0.0, %v1393
        %1395 = vmatprep.mubr.f32.mxu0 %v1208
        %1396 = vmatmul.mubr.f32.gmra.mrb[0].mxu0 %v1207
        %v1397 = vpop.f32.mrb[0].mxu0
        %v1398 = vadd.f32 0.0, %v1397
        %v1399 = vpop.f32.mrb[0].mxu0
        %v1400 = vadd.f32 0.0, %v1399
        %1401 = vmatprep.mubr.f32.mxu0 %v1210
        %1402 = vmatmul.mubr.f32.gmra.mrb[0].mxu0 %v1209
        %v1403 = vpop.f32.mrb[0].mxu0
        %v1404 = vadd.f32 0.0, %v1403
        %v1405 = vpop.f32.mrb[0].mxu0
        %v1406 = vadd.f32 0.0, %v1405
        %1407 = vmatprep.mubr.f32.mxu0 %v1212
        %1408 = vmatmul.mubr.f32.gmra.mrb[0].mxu0 %v1211
        %v1409 = vpop.f32.mrb[0].mxu0
        %v1410 = vadd.f32 0.0, %v1409
        %v1411 = vpop.f32.mrb[0].mxu0
        %v1412 = vadd.f32 0.0, %v1411
        %1413 = vmatprep.mubr.f32.mxu0 %v1214
        %1414 = vmatmul.mubr.f32.gmra.mrb[0].mxu0 %v1213
        %v1415 = vpop.f32.mrb[0].mxu0
        %v1416 = vadd.f32 0.0, %v1415
        %v1417 = vpop.f32.mrb[0].mxu0
        %v1418 = vadd.f32 0.0, %v1417
        %1419 = vmatprep.mubr.f32.mxu0 %v1216
        %1420 = vmatmul.mubr.f32.gmra.mrb[0].mxu0 %v1215
        %v1421 = vpop.f32.mrb[0].mxu0
        %v1422 = vadd.f32 0.0, %v1421
        %v1423 = vpop.f32.mrb[0].mxu0
        %v1424 = vadd.f32 0.0, %v1423
        %1425 = vmatprep.mubr.f32.mxu0 %v1218
        %1426 = vmatmul.mubr.f32.gmra.mrb[0].mxu0 %v1217
        %v1427 = vpop.f32.mrb[0].mxu0
        %v1428 = vadd.f32 0.0, %v1427
        %v1429 = vpop.f32.mrb[0].mxu0
        %v1430 = vadd.f32 0.0, %v1429
        %1431 = vmatprep.mubr.f32.mxu0 %v1220
        %1432 = vmatmul.mubr.f32.gmra.mrb[0].mxu0 %v1219
        %v1433 = vpop.f32.mrb[0].mxu0
        %v1434 = vadd.f32 0.0, %v1433
        %v1435 = vpop.f32.mrb[0].mxu0
        %v1436 = vadd.f32 0.0, %v1435
        %1437 = vmatprep.mubr.f32.mxu0 %v1222
        %1438 = vmatmul.mubr.f32.gmra.mrb[0].mxu0 %v1221
        %v1439 = vpop.f32.mrb[0].mxu0
        %v1440 = vadd.f32 0.0, %v1439
        %v1441 = vpop.f32.mrb[0].mxu0
        %v1442 = vadd.f32 0.0, %v1441
        %1443 = vmatprep.mubr.f32.mxu0 %v1224
        %1444 = vmatmul.mubr.f32.gmra.mrb[0].mxu0 %v1223
        %v1445 = vpop.f32.mrb[0].mxu0
        %v1446 = vadd.f32 0.0, %v1445
        %v1447 = vpop.f32.mrb[0].mxu0
        %v1448 = vadd.f32 0.0, %v1447
        %1449 = vmatprep.mubr.f32.mxu0 %v1226
        %1450 = vmatmul.mubr.f32.gmra.mrb[0].mxu0 %v1225
        %v1451 = vpop.f32.mrb[0].mxu0
        %v1452 = vadd.f32 0.0, %v1451
        %v1453 = vpop.f32.mrb[0].mxu0
        %v1454 = vadd.f32 0.0, %v1453
        %1455 = vmatprep.mubr.f32.mxu0 %v1228
        %1456 = vmatmul.mubr.f32.gmra.mrb[0].mxu0 %v1227
        %v1457 = vpop.f32.mrb[0].mxu0
        %v1458 = vadd.f32 0.0, %v1457
        %v1459 = vpop.f32.mrb[0].mxu0
        %v1460 = vadd.f32 0.0, %v1459
        %1461 = vdwg.mxu0
        %1463 = vset.pattern.permute.xlu0 0
        %1464 = vperm.xlu0 %1463, %v1229
        %v1465 = vpop.permute.xlu0 %1464
        %1468 = vset.pattern.permute.xlu0 0
        %1469 = vperm.xlu0 %1468, %v1230
        %v1470 = vpop.permute.xlu0 %1469
        %1473 = vset.pattern.permute.xlu0 0
        %1474 = vperm.xlu0 %1473, %v1231
        %v1475 = vpop.permute.xlu0 %1474
        %1478 = vset.pattern.permute.xlu0 0
        %1479 = vperm.xlu0 %1478, %v1232
        %v1480 = vpop.permute.xlu0 %1479
        %1483 = vset.pattern.permute.xlu0 0
        %1484 = vperm.xlu0 %1483, %v1233
        %v1485 = vpop.permute.xlu0 %1484
        %1488 = vset.pattern.permute.xlu0 0
        %1489 = vperm.xlu0 %1488, %v1234
        %v1490 = vpop.permute.xlu0 %1489
        %1493 = vset.pattern.permute.xlu0 0
        %1494 = vperm.xlu0 %1493, %v1235
        %v1495 = vpop.permute.xlu0 %1494
        %1498 = vset.pattern.permute.xlu0 0
        %1499 = vperm.xlu0 %1498, %v1236
        %v1500 = vpop.permute.xlu0 %1499
        %1503 = vset.pattern.permute.xlu0 0
        %1504 = vperm.xlu0 %1503, %v1237
        %v1505 = vpop.permute.xlu0 %1504
        %1508 = vset.pattern.permute.xlu0 0
        %1509 = vperm.xlu0 %1508, %v1238
        %v1510 = vpop.permute.xlu0 %1509
        %1513 = vset.pattern.permute.xlu0 0
        %1514 = vperm.xlu0 %1513, %v1239
        %v1515 = vpop.permute.xlu0 %1514
        %1518 = vset.pattern.permute.xlu0 0
        %1519 = vperm.xlu0 %1518, %v1240
        %v1520 = vpop.permute.xlu0 %1519
        %1523 = vset.pattern.permute.xlu0 0
        %1524 = vperm.xlu0 %1523, %v1241
        %v1525 = vpop.permute.xlu0 %1524
        %1528 = vset.pattern.permute.xlu0 0
        %1529 = vperm.xlu0 %1528, %v1242
        %v1530 = vpop.permute.xlu0 %1529
        %1533 = vset.pattern.permute.xlu0 0
        %1534 = vperm.xlu0 %1533, %v1243
        %v1535 = vpop.permute.xlu0 %1534
        %1538 = vset.pattern.permute.xlu0 0
        %1539 = vperm.xlu0 %1538, %v1244
        %v1540 = vpop.permute.xlu0 %1539
        %1543 = vset.pattern.permute.xlu0 0
        %1544 = vperm.xlu0 %1543, %v1245
        %v1545 = vpop.permute.xlu0 %1544
        %1548 = vset.pattern.permute.xlu0 0
        %1549 = vperm.xlu0 %1548, %v1246
        %v1550 = vpop.permute.xlu0 %1549
        %1553 = vset.pattern.permute.xlu0 0
        %1554 = vperm.xlu0 %1553, %v1247
        %v1555 = vpop.permute.xlu0 %1554
        %1558 = vset.pattern.permute.xlu0 0
        %1559 = vperm.xlu0 %1558, %v1248
        %v1560 = vpop.permute.xlu0 %1559
        %1563 = vset.pattern.permute.xlu0 0
        %1564 = vperm.xlu0 %1563, %v1249
        %v1565 = vpop.permute.xlu0 %1564
        %1568 = vset.pattern.permute.xlu0 0
        %1569 = vperm.xlu0 %1568, %v1250
        %v1570 = vpop.permute.xlu0 %1569
        %1573 = vset.pattern.permute.xlu0 0
        %1574 = vperm.xlu0 %1573, %v1251
        %v1575 = vpop.permute.xlu0 %1574
        %1578 = vset.pattern.permute.xlu0 0
        %1579 = vperm.xlu0 %1578, %v1252
        %v1580 = vpop.permute.xlu0 %1579
        %v1582 = vadd.f32 %v1465, %v1320
        %v1583 = vadd.f32 %v1465, %v1322
        %v1584 = vadd.f32 %v1470, %v1326
        %v1585 = vadd.f32 %v1470, %v1328
        %v1586 = vadd.f32 %v1475, %v1332
        %v1587 = vadd.f32 %v1475, %v1334
        %v1588 = vadd.f32 %v1480, %v1338
        %v1589 = vadd.f32 %v1480, %v1340
        %v1590 = vadd.f32 %v1485, %v1344
        %v1591 = vadd.f32 %v1485, %v1346
        %v1592 = vadd.f32 %v1490, %v1350
        %v1593 = vadd.f32 %v1490, %v1352
        %v1594 = vadd.f32 %v1495, %v1356
        %v1595 = vadd.f32 %v1495, %v1358
        %v1596 = vadd.f32 %v1500, %v1362
        %v1597 = vadd.f32 %v1500, %v1364
        %v1598 = vadd.f32 %v1505, %v1368
        %v1599 = vadd.f32 %v1505, %v1370
        %v1600 = vadd.f32 %v1510, %v1374
        %v1601 = vadd.f32 %v1510, %v1376
        %v1602 = vadd.f32 %v1515, %v1380
        %v1603 = vadd.f32 %v1515, %v1382
        %v1604 = vadd.f32 %v1520, %v1386
        %v1605 = vadd.f32 %v1520, %v1388
        %v1606 = vadd.f32 %v1525, %v1392
        %v1607 = vadd.f32 %v1525, %v1394
        %v1608 = vadd.f32 %v1530, %v1398
        %v1609 = vadd.f32 %v1530, %v1400
        %v1610 = vadd.f32 %v1535, %v1404
        %v1611 = vadd.f32 %v1535, %v1406
        %v1612 = vadd.f32 %v1540, %v1410
        %v1613 = vadd.f32 %v1540, %v1412
        %v1614 = vadd.f32 %v1545, %v1416
        %v1615 = vadd.f32 %v1545, %v1418
        %v1616 = vadd.f32 %v1550, %v1422
        %v1617 = vadd.f32 %v1550, %v1424
        %v1618 = vadd.f32 %v1555, %v1428
        %v1619 = vadd.f32 %v1555, %v1430
        %v1620 = vadd.f32 %v1560, %v1434
        %v1621 = vadd.f32 %v1560, %v1436
        %v1622 = vadd.f32 %v1565, %v1440
        %v1623 = vadd.f32 %v1565, %v1442
        %v1624 = vadd.f32 %v1570, %v1446
        %v1625 = vadd.f32 %v1570, %v1448
        %v1626 = vadd.f32 %v1575, %v1452
        %v1627 = vadd.f32 %v1575, %v1454
        %v1628 = vadd.f32 %v1580, %v1458
        %v1629 = vadd.f32 %v1580, %v1460
        %v1630 = vmul.f32 %v1582, %v490
        %v1631 = vmul.f32 %v1583, %v491
        %v1632 = vmul.f32 %v1584, %v490
        %v1633 = vmul.f32 %v1585, %v491
        %v1634 = vmul.f32 %v1586, %v490
        %v1635 = vmul.f32 %v1587, %v491
        %v1636 = vmul.f32 %v1588, %v490
        %v1637 = vmul.f32 %v1589, %v491
        %v1638 = vmul.f32 %v1590, %v490
        %v1639 = vmul.f32 %v1591, %v491
        %v1640 = vmul.f32 %v1592, %v490
        %v1641 = vmul.f32 %v1593, %v491
        %v1642 = vmul.f32 %v1594, %v490
        %v1643 = vmul.f32 %v1595, %v491
        %v1644 = vmul.f32 %v1596, %v490
        %v1645 = vmul.f32 %v1597, %v491
        %v1646 = vmul.f32 %v1598, %v490
        %v1647 = vmul.f32 %v1599, %v491
        %v1648 = vmul.f32 %v1600, %v490
        %v1649 = vmul.f32 %v1601, %v491
        %v1650 = vmul.f32 %v1602, %v490
        %v1651 = vmul.f32 %v1603, %v491
        %v1652 = vmul.f32 %v1604, %v490
        %v1653 = vmul.f32 %v1605, %v491
        %v1654 = vmul.f32 %v1606, %v490
        %v1655 = vmul.f32 %v1607, %v491
        %v1656 = vmul.f32 %v1608, %v490
        %v1657 = vmul.f32 %v1609, %v491
        %v1658 = vmul.f32 %v1610, %v490
        %v1659 = vmul.f32 %v1611, %v491
        %v1660 = vmul.f32 %v1612, %v490
        %v1661 = vmul.f32 %v1613, %v491
        %v1662 = vmul.f32 %v1614, %v490
        %v1663 = vmul.f32 %v1615, %v491
        %v1664 = vmul.f32 %v1616, %v490
        %v1665 = vmul.f32 %v1617, %v491
        %v1666 = vmul.f32 %v1618, %v490
        %v1667 = vmul.f32 %v1619, %v491
        %v1668 = vmul.f32 %v1620, %v490
        %v1669 = vmul.f32 %v1621, %v491
        %v1670 = vmul.f32 %v1622, %v490
        %v1671 = vmul.f32 %v1623, %v491
        %v1672 = vmul.f32 %v1624, %v490
        %v1673 = vmul.f32 %v1625, %v491
        %v1674 = vmul.f32 %v1626, %v490
        %v1675 = vmul.f32 %v1627, %v491
        %v1676 = vmul.f32 %v1628, %v490
        %v1677 = vmul.f32 %v1629, %v491
        %v1678 = vadd.f32 %v1630, 1e-08
        %v1679 = vadd.f32 %v1631, 1e-08
        %v1680 = vadd.f32 %v1632, 1e-08
        %v1681 = vadd.f32 %v1633, 1e-08
        %v1682 = vadd.f32 %v1634, 1e-08
        %v1683 = vadd.f32 %v1635, 1e-08
        %v1684 = vadd.f32 %v1636, 1e-08
        %v1685 = vadd.f32 %v1637, 1e-08
        %v1686 = vadd.f32 %v1638, 1e-08
        %v1687 = vadd.f32 %v1639, 1e-08
        %v1688 = vadd.f32 %v1640, 1e-08
        %v1689 = vadd.f32 %v1641, 1e-08
        %v1690 = vadd.f32 %v1642, 1e-08
        %v1691 = vadd.f32 %v1643, 1e-08
        %v1692 = vadd.f32 %v1644, 1e-08
        %v1693 = vadd.f32 %v1645, 1e-08
        %v1694 = vadd.f32 %v1646, 1e-08
        %v1695 = vadd.f32 %v1647, 1e-08
        %v1696 = vadd.f32 %v1648, 1e-08
        %v1697 = vadd.f32 %v1649, 1e-08
        %v1698 = vadd.f32 %v1650, 1e-08
        %v1699 = vadd.f32 %v1651, 1e-08
        %v1700 = vadd.f32 %v1652, 1e-08
        %v1701 = vadd.f32 %v1653, 1e-08
        %v1702 = vadd.f32 %v1654, 1e-08
        %v1703 = vadd.f32 %v1655, 1e-08
        %v1704 = vadd.f32 %v1656, 1e-08
        %v1705 = vadd.f32 %v1657, 1e-08
        %v1706 = vadd.f32 %v1658, 1e-08
        %v1707 = vadd.f32 %v1659, 1e-08
        %v1708 = vadd.f32 %v1660, 1e-08
        %v1709 = vadd.f32 %v1661, 1e-08
        %v1710 = vadd.f32 %v1662, 1e-08
        %v1711 = vadd.f32 %v1663, 1e-08
        %v1712 = vadd.f32 %v1664, 1e-08
        %v1713 = vadd.f32 %v1665, 1e-08
        %v1714 = vadd.f32 %v1666, 1e-08
        %v1715 = vadd.f32 %v1667, 1e-08
        %v1716 = vadd.f32 %v1668, 1e-08
        %v1717 = vadd.f32 %v1669, 1e-08
        %v1718 = vadd.f32 %v1670, 1e-08
        %v1719 = vadd.f32 %v1671, 1e-08
        %v1720 = vadd.f32 %v1672, 1e-08
        %v1721 = vadd.f32 %v1673, 1e-08
        %v1722 = vadd.f32 %v1674, 1e-08
        %v1723 = vadd.f32 %v1675, 1e-08
        %v1724 = vadd.f32 %v1676, 1e-08
        %v1725 = vadd.f32 %v1677, 1e-08
        %v1726 = vrsqrt.pop %v1678
        %v1727 = vmul.f32 %v1678, %v1726
        %vm1728 = vcmp.eq.f32.partialorder %v1678, inf
        %v1729 = vsel %vm1728, %v1678, %v1727
        %vm1730 = vcmp.eq.f32.partialorder %v1678, 0.0
        %v1731 = vand.u32 %v1678, 2147483648
        %v1732 = vsel %vm1730, %v1731, %v1729
        %v1733 = vrsqrt.pop %v1679
        %v1734 = vmul.f32 %v1679, %v1733
        %vm1735 = vcmp.eq.f32.partialorder %v1679, inf
        %v1736 = vsel %vm1735, %v1679, %v1734
        %vm1737 = vcmp.eq.f32.partialorder %v1679, 0.0
        %v1738 = vand.u32 %v1679, 2147483648
        %v1739 = vsel %vm1737, %v1738, %v1736
        %v1740 = vrsqrt.pop %v1680
        %v1741 = vmul.f32 %v1680, %v1740
        %vm1742 = vcmp.eq.f32.partialorder %v1680, inf
        %v1743 = vsel %vm1742, %v1680, %v1741
        %vm1744 = vcmp.eq.f32.partialorder %v1680, 0.0
        %v1745 = vand.u32 %v1680, 2147483648
        %v1746 = vsel %vm1744, %v1745, %v1743
        %v1747 = vrsqrt.pop %v1681
        %v1748 = vmul.f32 %v1681, %v1747
        %vm1749 = vcmp.eq.f32.partialorder %v1681, inf
        %v1750 = vsel %vm1749, %v1681, %v1748
        %vm1751 = vcmp.eq.f32.partialorder %v1681, 0.0
        %v1752 = vand.u32 %v1681, 2147483648
        %v1753 = vsel %vm1751, %v1752, %v1750
        %v1754 = vrsqrt.pop %v1682
        %v1755 = vmul.f32 %v1682, %v1754
        %vm1756 = vcmp.eq.f32.partialorder %v1682, inf
        %v1757 = vsel %vm1756, %v1682, %v1755
        %vm1758 = vcmp.eq.f32.partialorder %v1682, 0.0
        %v1759 = vand.u32 %v1682, 2147483648
        %v1760 = vsel %vm1758, %v1759, %v1757
        %v1761 = vrsqrt.pop %v1683
        %v1762 = vmul.f32 %v1683, %v1761
        %vm1763 = vcmp.eq.f32.partialorder %v1683, inf
        %v1764 = vsel %vm1763, %v1683, %v1762
        %vm1765 = vcmp.eq.f32.partialorder %v1683, 0.0
        %v1766 = vand.u32 %v1683, 2147483648
        %v1767 = vsel %vm1765, %v1766, %v1764
        %v1768 = vrsqrt.pop %v1684
        %v1769 = vmul.f32 %v1684, %v1768
        %vm1770 = vcmp.eq.f32.partialorder %v1684, inf
        %v1771 = vsel %vm1770, %v1684, %v1769
        %vm1772 = vcmp.eq.f32.partialorder %v1684, 0.0
        %v1773 = vand.u32 %v1684, 2147483648
        %v1774 = vsel %vm1772, %v1773, %v1771
        %v1775 = vrsqrt.pop %v1685
        %v1776 = vmul.f32 %v1685, %v1775
        %vm1777 = vcmp.eq.f32.partialorder %v1685, inf
        %v1778 = vsel %vm1777, %v1685, %v1776
        %vm1779 = vcmp.eq.f32.partialorder %v1685, 0.0
        %v1780 = vand.u32 %v1685, 2147483648
        %v1781 = vsel %vm1779, %v1780, %v1778
        %v1782 = vrsqrt.pop %v1686
        %v1783 = vmul.f32 %v1686, %v1782
        %vm1784 = vcmp.eq.f32.partialorder %v1686, inf
        %v1785 = vsel %vm1784, %v1686, %v1783
        %vm1786 = vcmp.eq.f32.partialorder %v1686, 0.0
        %v1787 = vand.u32 %v1686, 2147483648
        %v1788 = vsel %vm1786, %v1787, %v1785
        %v1789 = vrsqrt.pop %v1687
        %v1790 = vmul.f32 %v1687, %v1789
        %vm1791 = vcmp.eq.f32.partialorder %v1687, inf
        %v1792 = vsel %vm1791, %v1687, %v1790
        %vm1793 = vcmp.eq.f32.partialorder %v1687, 0.0
        %v1794 = vand.u32 %v1687, 2147483648
        %v1795 = vsel %vm1793, %v1794, %v1792
        %v1796 = vrsqrt.pop %v1688
        %v1797 = vmul.f32 %v1688, %v1796
        %vm1798 = vcmp.eq.f32.partialorder %v1688, inf
        %v1799 = vsel %vm1798, %v1688, %v1797
        %vm1800 = vcmp.eq.f32.partialorder %v1688, 0.0
        %v1801 = vand.u32 %v1688, 2147483648
        %v1802 = vsel %vm1800, %v1801, %v1799
        %v1803 = vrsqrt.pop %v1689
        %v1804 = vmul.f32 %v1689, %v1803
        %vm1805 = vcmp.eq.f32.partialorder %v1689, inf
        %v1806 = vsel %vm1805, %v1689, %v1804
        %vm1807 = vcmp.eq.f32.partialorder %v1689, 0.0
        %v1808 = vand.u32 %v1689, 2147483648
        %v1809 = vsel %vm1807, %v1808, %v1806
        %v1810 = vrsqrt.pop %v1690
        %v1811 = vmul.f32 %v1690, %v1810
        %vm1812 = vcmp.eq.f32.partialorder %v1690, inf
        %v1813 = vsel %vm1812, %v1690, %v1811
        %vm1814 = vcmp.eq.f32.partialorder %v1690, 0.0
        %v1815 = vand.u32 %v1690, 2147483648
        %v1816 = vsel %vm1814, %v1815, %v1813
        %v1817 = vrsqrt.pop %v1691
        %v1818 = vmul.f32 %v1691, %v1817
        %vm1819 = vcmp.eq.f32.partialorder %v1691, inf
        %v1820 = vsel %vm1819, %v1691, %v1818
        %vm1821 = vcmp.eq.f32.partialorder %v1691, 0.0
        %v1822 = vand.u32 %v1691, 2147483648
        %v1823 = vsel %vm1821, %v1822, %v1820
        %v1824 = vrsqrt.pop %v1692
        %v1825 = vmul.f32 %v1692, %v1824
        %vm1826 = vcmp.eq.f32.partialorder %v1692, inf
        %v1827 = vsel %vm1826, %v1692, %v1825
        %vm1828 = vcmp.eq.f32.partialorder %v1692, 0.0
        %v1829 = vand.u32 %v1692, 2147483648
        %v1830 = vsel %vm1828, %v1829, %v1827
        %v1831 = vrsqrt.pop %v1693
        %v1832 = vmul.f32 %v1693, %v1831
        %vm1833 = vcmp.eq.f32.partialorder %v1693, inf
        %v1834 = vsel %vm1833, %v1693, %v1832
        %vm1835 = vcmp.eq.f32.partialorder %v1693, 0.0
        %v1836 = vand.u32 %v1693, 2147483648
        %v1837 = vsel %vm1835, %v1836, %v1834
        %v1838 = vrsqrt.pop %v1694
        %v1839 = vmul.f32 %v1694, %v1838
        %vm1840 = vcmp.eq.f32.partialorder %v1694, inf
        %v1841 = vsel %vm1840, %v1694, %v1839
        %vm1842 = vcmp.eq.f32.partialorder %v1694, 0.0
        %v1843 = vand.u32 %v1694, 2147483648
        %v1844 = vsel %vm1842, %v1843, %v1841
        %v1845 = vrsqrt.pop %v1695
        %v1846 = vmul.f32 %v1695, %v1845
        %vm1847 = vcmp.eq.f32.partialorder %v1695, inf
        %v1848 = vsel %vm1847, %v1695, %v1846
        %vm1849 = vcmp.eq.f32.partialorder %v1695, 0.0
        %v1850 = vand.u32 %v1695, 2147483648
        %v1851 = vsel %vm1849, %v1850, %v1848
        %v1852 = vrsqrt.pop %v1696
        %v1853 = vmul.f32 %v1696, %v1852
        %vm1854 = vcmp.eq.f32.partialorder %v1696, inf
        %v1855 = vsel %vm1854, %v1696, %v1853
        %vm1856 = vcmp.eq.f32.partialorder %v1696, 0.0
        %v1857 = vand.u32 %v1696, 2147483648
        %v1858 = vsel %vm1856, %v1857, %v1855
        %v1859 = vrsqrt.pop %v1697
        %v1860 = vmul.f32 %v1697, %v1859
        %vm1861 = vcmp.eq.f32.partialorder %v1697, inf
        %v1862 = vsel %vm1861, %v1697, %v1860
        %vm1863 = vcmp.eq.f32.partialorder %v1697, 0.0
        %v1864 = vand.u32 %v1697, 2147483648
        %v1865 = vsel %vm1863, %v1864, %v1862
        %v1866 = vrsqrt.pop %v1698
        %v1867 = vmul.f32 %v1698, %v1866
        %vm1868 = vcmp.eq.f32.partialorder %v1698, inf
        %v1869 = vsel %vm1868, %v1698, %v1867
        %vm1870 = vcmp.eq.f32.partialorder %v1698, 0.0
        %v1871 = vand.u32 %v1698, 2147483648
        %v1872 = vsel %vm1870, %v1871, %v1869
        %v1873 = vrsqrt.pop %v1699
        %v1874 = vmul.f32 %v1699, %v1873
        %vm1875 = vcmp.eq.f32.partialorder %v1699, inf
        %v1876 = vsel %vm1875, %v1699, %v1874
        %vm1877 = vcmp.eq.f32.partialorder %v1699, 0.0
        %v1878 = vand.u32 %v1699, 2147483648
        %v1879 = vsel %vm1877, %v1878, %v1876
        %v1880 = vrsqrt.pop %v1700
        %v1881 = vmul.f32 %v1700, %v1880
        %vm1882 = vcmp.eq.f32.partialorder %v1700, inf
        %v1883 = vsel %vm1882, %v1700, %v1881
        %vm1884 = vcmp.eq.f32.partialorder %v1700, 0.0
        %v1885 = vand.u32 %v1700, 2147483648
        %v1886 = vsel %vm1884, %v1885, %v1883
        %v1887 = vrsqrt.pop %v1701
        %v1888 = vmul.f32 %v1701, %v1887
        %vm1889 = vcmp.eq.f32.partialorder %v1701, inf
        %v1890 = vsel %vm1889, %v1701, %v1888
        %vm1891 = vcmp.eq.f32.partialorder %v1701, 0.0
        %v1892 = vand.u32 %v1701, 2147483648
        %v1893 = vsel %vm1891, %v1892, %v1890
        %v1894 = vrsqrt.pop %v1702
        %v1895 = vmul.f32 %v1702, %v1894
        %vm1896 = vcmp.eq.f32.partialorder %v1702, inf
        %v1897 = vsel %vm1896, %v1702, %v1895
        %vm1898 = vcmp.eq.f32.partialorder %v1702, 0.0
        %v1899 = vand.u32 %v1702, 2147483648
        %v1900 = vsel %vm1898, %v1899, %v1897
        %v1901 = vrsqrt.pop %v1703
        %v1902 = vmul.f32 %v1703, %v1901
        %vm1903 = vcmp.eq.f32.partialorder %v1703, inf
        %v1904 = vsel %vm1903, %v1703, %v1902
        %vm1905 = vcmp.eq.f32.partialorder %v1703, 0.0
        %v1906 = vand.u32 %v1703, 2147483648
        %v1907 = vsel %vm1905, %v1906, %v1904
        %v1908 = vrsqrt.pop %v1704
        %v1909 = vmul.f32 %v1704, %v1908
        %vm1910 = vcmp.eq.f32.partialorder %v1704, inf
        %v1911 = vsel %vm1910, %v1704, %v1909
        %vm1912 = vcmp.eq.f32.partialorder %v1704, 0.0
        %v1913 = vand.u32 %v1704, 2147483648
        %v1914 = vsel %vm1912, %v1913, %v1911
        %v1915 = vrsqrt.pop %v1705
        %v1916 = vmul.f32 %v1705, %v1915
        %vm1917 = vcmp.eq.f32.partialorder %v1705, inf
        %v1918 = vsel %vm1917, %v1705, %v1916
        %vm1919 = vcmp.eq.f32.partialorder %v1705, 0.0
        %v1920 = vand.u32 %v1705, 2147483648
        %v1921 = vsel %vm1919, %v1920, %v1918
        %v1922 = vrsqrt.pop %v1706
        %v1923 = vmul.f32 %v1706, %v1922
        %vm1924 = vcmp.eq.f32.partialorder %v1706, inf
        %v1925 = vsel %vm1924, %v1706, %v1923
        %vm1926 = vcmp.eq.f32.partialorder %v1706, 0.0
        %v1927 = vand.u32 %v1706, 2147483648
        %v1928 = vsel %vm1926, %v1927, %v1925
        %v1929 = vrsqrt.pop %v1707
        %v1930 = vmul.f32 %v1707, %v1929
        %vm1931 = vcmp.eq.f32.partialorder %v1707, inf
        %v1932 = vsel %vm1931, %v1707, %v1930
        %vm1933 = vcmp.eq.f32.partialorder %v1707, 0.0
        %v1934 = vand.u32 %v1707, 2147483648
        %v1935 = vsel %vm1933, %v1934, %v1932
        %v1936 = vrsqrt.pop %v1708
        %v1937 = vmul.f32 %v1708, %v1936
        %vm1938 = vcmp.eq.f32.partialorder %v1708, inf
        %v1939 = vsel %vm1938, %v1708, %v1937
        %vm1940 = vcmp.eq.f32.partialorder %v1708, 0.0
        %v1941 = vand.u32 %v1708, 2147483648
        %v1942 = vsel %vm1940, %v1941, %v1939
        %v1943 = vrsqrt.pop %v1709
        %v1944 = vmul.f32 %v1709, %v1943
        %vm1945 = vcmp.eq.f32.partialorder %v1709, inf
        %v1946 = vsel %vm1945, %v1709, %v1944
        %vm1947 = vcmp.eq.f32.partialorder %v1709, 0.0
        %v1948 = vand.u32 %v1709, 2147483648
        %v1949 = vsel %vm1947, %v1948, %v1946
        %v1950 = vrsqrt.pop %v1710
        %v1951 = vmul.f32 %v1710, %v1950
        %vm1952 = vcmp.eq.f32.partialorder %v1710, inf
        %v1953 = vsel %vm1952, %v1710, %v1951
        %vm1954 = vcmp.eq.f32.partialorder %v1710, 0.0
        %v1955 = vand.u32 %v1710, 2147483648
        %v1956 = vsel %vm1954, %v1955, %v1953
        %v1957 = vrsqrt.pop %v1711
        %v1958 = vmul.f32 %v1711, %v1957
        %vm1959 = vcmp.eq.f32.partialorder %v1711, inf
        %v1960 = vsel %vm1959, %v1711, %v1958
        %vm1961 = vcmp.eq.f32.partialorder %v1711, 0.0
        %v1962 = vand.u32 %v1711, 2147483648
        %v1963 = vsel %vm1961, %v1962, %v1960
        %v1964 = vrsqrt.pop %v1712
        %v1965 = vmul.f32 %v1712, %v1964
        %vm1966 = vcmp.eq.f32.partialorder %v1712, inf
        %v1967 = vsel %vm1966, %v1712, %v1965
        %vm1968 = vcmp.eq.f32.partialorder %v1712, 0.0
        %v1969 = vand.u32 %v1712, 2147483648
        %v1970 = vsel %vm1968, %v1969, %v1967
        %v1971 = vrsqrt.pop %v1713
        %v1972 = vmul.f32 %v1713, %v1971
        %vm1973 = vcmp.eq.f32.partialorder %v1713, inf
        %v1974 = vsel %vm1973, %v1713, %v1972
        %vm1975 = vcmp.eq.f32.partialorder %v1713, 0.0
        %v1976 = vand.u32 %v1713, 2147483648
        %v1977 = vsel %vm1975, %v1976, %v1974
        %v1978 = vrsqrt.pop %v1714
        %v1979 = vmul.f32 %v1714, %v1978
        %vm1980 = vcmp.eq.f32.partialorder %v1714, inf
        %v1981 = vsel %vm1980, %v1714, %v1979
        %vm1982 = vcmp.eq.f32.partialorder %v1714, 0.0
        %v1983 = vand.u32 %v1714, 2147483648
        %v1984 = vsel %vm1982, %v1983, %v1981
        %v1985 = vrsqrt.pop %v1715
        %v1986 = vmul.f32 %v1715, %v1985
        %vm1987 = vcmp.eq.f32.partialorder %v1715, inf
        %v1988 = vsel %vm1987, %v1715, %v1986
        %vm1989 = vcmp.eq.f32.partialorder %v1715, 0.0
        %v1990 = vand.u32 %v1715, 2147483648
        %v1991 = vsel %vm1989, %v1990, %v1988
        %v1992 = vrsqrt.pop %v1716
        %v1993 = vmul.f32 %v1716, %v1992
        %vm1994 = vcmp.eq.f32.partialorder %v1716, inf
        %v1995 = vsel %vm1994, %v1716, %v1993
        %vm1996 = vcmp.eq.f32.partialorder %v1716, 0.0
        %v1997 = vand.u32 %v1716, 2147483648
        %v1998 = vsel %vm1996, %v1997, %v1995
        %v1999 = vrsqrt.pop %v1717
        %v2000 = vmul.f32 %v1717, %v1999
        %vm2001 = vcmp.eq.f32.partialorder %v1717, inf
        %v2002 = vsel %vm2001, %v1717, %v2000
        %vm2003 = vcmp.eq.f32.partialorder %v1717, 0.0
        %v2004 = vand.u32 %v1717, 2147483648
        %v2005 = vsel %vm2003, %v2004, %v2002
        %v2006 = vrsqrt.pop %v1718
        %v2007 = vmul.f32 %v1718, %v2006
        %vm2008 = vcmp.eq.f32.partialorder %v1718, inf
        %v2009 = vsel %vm2008, %v1718, %v2007
        %vm2010 = vcmp.eq.f32.partialorder %v1718, 0.0
        %v2011 = vand.u32 %v1718, 2147483648
        %v2012 = vsel %vm2010, %v2011, %v2009
        %v2013 = vrsqrt.pop %v1719
        %v2014 = vmul.f32 %v1719, %v2013
        %vm2015 = vcmp.eq.f32.partialorder %v1719, inf
        %v2016 = vsel %vm2015, %v1719, %v2014
        %vm2017 = vcmp.eq.f32.partialorder %v1719, 0.0
        %v2018 = vand.u32 %v1719, 2147483648
        %v2019 = vsel %vm2017, %v2018, %v2016
        %v2020 = vrsqrt.pop %v1720
        %v2021 = vmul.f32 %v1720, %v2020
        %vm2022 = vcmp.eq.f32.partialorder %v1720, inf
        %v2023 = vsel %vm2022, %v1720, %v2021
        %vm2024 = vcmp.eq.f32.partialorder %v1720, 0.0
        %v2025 = vand.u32 %v1720, 2147483648
        %v2026 = vsel %vm2024, %v2025, %v2023
        %v2027 = vrsqrt.pop %v1721
        %v2028 = vmul.f32 %v1721, %v2027
        %vm2029 = vcmp.eq.f32.partialorder %v1721, inf
        %v2030 = vsel %vm2029, %v1721, %v2028
        %vm2031 = vcmp.eq.f32.partialorder %v1721, 0.0
        %v2032 = vand.u32 %v1721, 2147483648
        %v2033 = vsel %vm2031, %v2032, %v2030
        %v2034 = vrsqrt.pop %v1722
        %v2035 = vmul.f32 %v1722, %v2034
        %vm2036 = vcmp.eq.f32.partialorder %v1722, inf
        %v2037 = vsel %vm2036, %v1722, %v2035
        %vm2038 = vcmp.eq.f32.partialorder %v1722, 0.0
        %v2039 = vand.u32 %v1722, 2147483648
        %v2040 = vsel %vm2038, %v2039, %v2037
        %v2041 = vrsqrt.pop %v1723
        %v2042 = vmul.f32 %v1723, %v2041
        %vm2043 = vcmp.eq.f32.partialorder %v1723, inf
        %v2044 = vsel %vm2043, %v1723, %v2042
        %vm2045 = vcmp.eq.f32.partialorder %v1723, 0.0
        %v2046 = vand.u32 %v1723, 2147483648
        %v2047 = vsel %vm2045, %v2046, %v2044
        %v2048 = vrsqrt.pop %v1724
        %v2049 = vmul.f32 %v1724, %v2048
        %vm2050 = vcmp.eq.f32.partialorder %v1724, inf
        %v2051 = vsel %vm2050, %v1724, %v2049
        %vm2052 = vcmp.eq.f32.partialorder %v1724, 0.0
        %v2053 = vand.u32 %v1724, 2147483648
        %v2054 = vsel %vm2052, %v2053, %v2051
        %v2055 = vrsqrt.pop %v1725
        %v2056 = vmul.f32 %v1725, %v2055
        %vm2057 = vcmp.eq.f32.partialorder %v1725, inf
        %v2058 = vsel %vm2057, %v1725, %v2056
        %vm2059 = vcmp.eq.f32.partialorder %v1725, 0.0
        %v2060 = vand.u32 %v1725, 2147483648
        %v2061 = vsel %vm2059, %v2060, %v2058
        %v2062 = vadd.f32 %v1732, 1e-08
        %v2063 = vadd.f32 %v1739, 1e-08
        %v2064 = vadd.f32 %v1746, 1e-08
        %v2065 = vadd.f32 %v1753, 1e-08
        %v2066 = vadd.f32 %v1760, 1e-08
        %v2067 = vadd.f32 %v1767, 1e-08
        %v2068 = vadd.f32 %v1774, 1e-08
        %v2069 = vadd.f32 %v1781, 1e-08
        %v2070 = vadd.f32 %v1788, 1e-08
        %v2071 = vadd.f32 %v1795, 1e-08
        %v2072 = vadd.f32 %v1802, 1e-08
        %v2073 = vadd.f32 %v1809, 1e-08
        %v2074 = vadd.f32 %v1816, 1e-08
        %v2075 = vadd.f32 %v1823, 1e-08
        %v2076 = vadd.f32 %v1830, 1e-08
        %v2077 = vadd.f32 %v1837, 1e-08
        %v2078 = vadd.f32 %v1844, 1e-08
        %v2079 = vadd.f32 %v1851, 1e-08
        %v2080 = vadd.f32 %v1858, 1e-08
        %v2081 = vadd.f32 %v1865, 1e-08
        %v2082 = vadd.f32 %v1872, 1e-08
        %v2083 = vadd.f32 %v1879, 1e-08
        %v2084 = vadd.f32 %v1886, 1e-08
        %v2085 = vadd.f32 %v1893, 1e-08
        %v2086 = vadd.f32 %v1900, 1e-08
        %v2087 = vadd.f32 %v1907, 1e-08
        %v2088 = vadd.f32 %v1914, 1e-08
        %v2089 = vadd.f32 %v1921, 1e-08
        %v2090 = vadd.f32 %v1928, 1e-08
        %v2091 = vadd.f32 %v1935, 1e-08
        %v2092 = vadd.f32 %v1942, 1e-08
        %v2093 = vadd.f32 %v1949, 1e-08
        %v2094 = vadd.f32 %v1956, 1e-08
        %v2095 = vadd.f32 %v1963, 1e-08
        %v2096 = vadd.f32 %v1970, 1e-08
        %v2097 = vadd.f32 %v1977, 1e-08
        %v2098 = vadd.f32 %v1984, 1e-08
        %v2099 = vadd.f32 %v1991, 1e-08
        %v2100 = vadd.f32 %v1998, 1e-08
        %v2101 = vadd.f32 %v2005, 1e-08
        %v2102 = vadd.f32 %v2012, 1e-08
        %v2103 = vadd.f32 %v2019, 1e-08
        %v2104 = vadd.f32 %v2026, 1e-08
        %v2105 = vadd.f32 %v2033, 1e-08
        %v2106 = vadd.f32 %v2040, 1e-08
        %v2107 = vadd.f32 %v2047, 1e-08
        %v2108 = vadd.f32 %v2054, 1e-08
        %v2109 = vadd.f32 %v2061, 1e-08
        %v2110 = vrcp.pop %v2062
        %v2111 = vrcp.pop %v2063
        %v2112 = vrcp.pop %v2064
        %v2113 = vrcp.pop %v2065
        %v2114 = vrcp.pop %v2066
        %v2115 = vrcp.pop %v2067
        %v2116 = vrcp.pop %v2068
        %v2117 = vrcp.pop %v2069
        %v2118 = vrcp.pop %v2070
        %v2119 = vrcp.pop %v2071
        %v2120 = vrcp.pop %v2072
        %v2121 = vrcp.pop %v2073
        %v2122 = vrcp.pop %v2074
        %v2123 = vrcp.pop %v2075
        %v2124 = vrcp.pop %v2076
        %v2125 = vrcp.pop %v2077
        %v2126 = vrcp.pop %v2078
        %v2127 = vrcp.pop %v2079
        %v2128 = vrcp.pop %v2080
        %v2129 = vrcp.pop %v2081
        %v2130 = vrcp.pop %v2082
        %v2131 = vrcp.pop %v2083
        %v2132 = vrcp.pop %v2084
        %v2133 = vrcp.pop %v2085
        %v2134 = vrcp.pop %v2086
        %v2135 = vrcp.pop %v2087
        %v2136 = vrcp.pop %v2088
        %v2137 = vrcp.pop %v2089
        %v2138 = vrcp.pop %v2090
        %v2139 = vrcp.pop %v2091
        %v2140 = vrcp.pop %v2092
        %v2141 = vrcp.pop %v2093
        %v2142 = vrcp.pop %v2094
        %v2143 = vrcp.pop %v2095
        %v2144 = vrcp.pop %v2096
        %v2145 = vrcp.pop %v2097
        %v2146 = vrcp.pop %v2098
        %v2147 = vrcp.pop %v2099
        %v2148 = vrcp.pop %v2100
        %v2149 = vrcp.pop %v2101
        %v2150 = vrcp.pop %v2102
        %v2151 = vrcp.pop %v2103
        %v2152 = vrcp.pop %v2104
        %v2153 = vrcp.pop %v2105
        %v2154 = vrcp.pop %v2106
        %v2155 = vrcp.pop %v2107
        %v2156 = vrcp.pop %v2108
        %v2157 = vrcp.pop %v2109
        %s2158 = sld [smem:[#allocation4]]
        %s2159 = sld [smem:[#allocation4 + $0x1]]
        %v2160 = vmul.f32 %v989, %v2110
        %v2161 = vmul.f32 %v990, %v2111
        %v2162 = vmul.f32 %v991, %v2112
        %v2163 = vmul.f32 %v992, %v2113
        %v2164 = vmul.f32 %v993, %v2114
        %v2165 = vmul.f32 %v994, %v2115
        %v2166 = vmul.f32 %v995, %v2116
        %v2167 = vmul.f32 %v996, %v2117
        %v2168 = vmul.f32 %v997, %v2118
        %v2169 = vmul.f32 %v998, %v2119
        %v2170 = vmul.f32 %v999, %v2120
        %v2171 = vmul.f32 %v1000, %v2121
        %v2172 = vmul.f32 %v1001, %v2122
        %v2173 = vmul.f32 %v1002, %v2123
        %v2174 = vmul.f32 %v1003, %v2124
        %v2175 = vmul.f32 %v1004, %v2125
        %v2176 = vmul.f32 %v1005, %v2126
        %v2177 = vmul.f32 %v1006, %v2127
        %v2178 = vmul.f32 %v1007, %v2128
        %v2179 = vmul.f32 %v1008, %v2129
        %v2180 = vmul.f32 %v1009, %v2130
        %v2181 = vmul.f32 %v1010, %v2131
        %v2182 = vmul.f32 %v1011, %v2132
        %v2183 = vmul.f32 %v1012, %v2133
        %v2184 = vmul.f32 %v1013, %v2134
        %v2185 = vmul.f32 %v1014, %v2135
        %v2186 = vmul.f32 %v1015, %v2136
        %v2187 = vmul.f32 %v1016, %v2137
        %v2188 = vmul.f32 %v1017, %v2138
        %v2189 = vmul.f32 %v1018, %v2139
        %v2190 = vmul.f32 %v1019, %v2140
        %v2191 = vmul.f32 %v1020, %v2141
        %v2192 = vmul.f32 %v1021, %v2142
        %v2193 = vmul.f32 %v1022, %v2143
        %v2194 = vmul.f32 %v1023, %v2144
        %v2195 = vmul.f32 %v1024, %v2145
        %v2196 = vmul.f32 %v1025, %v2146
        %v2197 = vmul.f32 %v1026, %v2147
        %v2198 = vmul.f32 %v1027, %v2148
        %v2199 = vmul.f32 %v1028, %v2149
        %v2200 = vmul.f32 %v1029, %v2150
        %v2201 = vmul.f32 %v1030, %v2151
        %v2202 = vmul.f32 %v1031, %v2152
        %v2203 = vmul.f32 %v1032, %v2153
        %v2204 = vmul.f32 %v1033, %v2154
        %v2205 = vmul.f32 %v1034, %v2155
        %v2206 = vmul.f32 %v1035, %v2156
        %v2207 = vmul.f32 %v1036, %v2157
        %v2208 = vmul.f32 %v1037, %v2110
        %v2209 = vmul.f32 %v1038, %v2111
        %v2210 = vmul.f32 %v1039, %v2112
        %v2211 = vmul.f32 %v1040, %v2113
        %v2212 = vmul.f32 %v1041, %v2114
        %v2213 = vmul.f32 %v1042, %v2115
        %v2214 = vmul.f32 %v1043, %v2116
        %v2215 = vmul.f32 %v1044, %v2117
        %v2216 = vmul.f32 %v1045, %v2118
        %v2217 = vmul.f32 %v1046, %v2119
        %v2218 = vmul.f32 %v1047, %v2120
        %v2219 = vmul.f32 %v1048, %v2121
        %v2220 = vmul.f32 %v1049, %v2122
        %v2221 = vmul.f32 %v1050, %v2123
        %v2222 = vmul.f32 %v1051, %v2124
        %v2223 = vmul.f32 %v1052, %v2125
        %v2224 = vmul.f32 %v1053, %v2126
        %v2225 = vmul.f32 %v1054, %v2127
        %v2226 = vmul.f32 %v1055, %v2128
        %v2227 = vmul.f32 %v1056, %v2129
        %v2228 = vmul.f32 %v1057, %v2130
        %v2229 = vmul.f32 %v1058, %v2131
        %v2230 = vmul.f32 %v1059, %v2132
        %v2231 = vmul.f32 %v1060, %v2133
        %v2232 = vmul.f32 %v1061, %v2134
        %v2233 = vmul.f32 %v1062, %v2135
        %v2234 = vmul.f32 %v1063, %v2136
        %v2235 = vmul.f32 %v1064, %v2137
        %v2236 = vmul.f32 %v1065, %v2138
        %v2237 = vmul.f32 %v1066, %v2139
        %v2238 = vmul.f32 %v1067, %v2140
        %v2239 = vmul.f32 %v1068, %v2141
        %v2240 = vmul.f32 %v1069, %v2142
        %v2241 = vmul.f32 %v1070, %v2143
        %v2242 = vmul.f32 %v1071, %v2144
        %v2243 = vmul.f32 %v1072, %v2145
        %v2244 = vmul.f32 %v1073, %v2146
        %v2245 = vmul.f32 %v1074, %v2147
        %v2246 = vmul.f32 %v1075, %v2148
        %v2247 = vmul.f32 %v1076, %v2149
        %v2248 = vmul.f32 %v1077, %v2150
        %v2249 = vmul.f32 %v1078, %v2151
        %v2250 = vmul.f32 %v1079, %v2152
        %v2251 = vmul.f32 %v1080, %v2153
        %v2252 = vmul.f32 %v1081, %v2154
        %v2253 = vmul.f32 %v1082, %v2155
        %v2254 = vmul.f32 %v1083, %v2156
        %v2255 = vmul.f32 %v1084, %v2157
        %v2256 = vstv %s2158
        %v2257 = vmul.f32 %v2160, %v2256
        %v2258 = vmul.f32 %v2161, %v2256
        %v2259 = vmul.f32 %v2162, %v2256
        %v2260 = vmul.f32 %v2163, %v2256
        %v2261 = vmul.f32 %v2164, %v2256
        %v2262 = vmul.f32 %v2165, %v2256
        %v2263 = vmul.f32 %v2166, %v2256
        %v2264 = vmul.f32 %v2167, %v2256
        %v2265 = vmul.f32 %v2168, %v2256
        %v2266 = vmul.f32 %v2169, %v2256
        %v2267 = vmul.f32 %v2170, %v2256
        %v2268 = vmul.f32 %v2171, %v2256
        %v2269 = vmul.f32 %v2172, %v2256
        %v2270 = vmul.f32 %v2173, %v2256
        %v2271 = vmul.f32 %v2174, %v2256
        %v2272 = vmul.f32 %v2175, %v2256
        %v2273 = vmul.f32 %v2176, %v2256
        %v2274 = vmul.f32 %v2177, %v2256
        %v2275 = vmul.f32 %v2178, %v2256
        %v2276 = vmul.f32 %v2179, %v2256
        %v2277 = vmul.f32 %v2180, %v2256
        %v2278 = vmul.f32 %v2181, %v2256
        %v2279 = vmul.f32 %v2182, %v2256
        %v2280 = vmul.f32 %v2183, %v2256
        %v2281 = vmul.f32 %v2184, %v2256
        %v2282 = vmul.f32 %v2185, %v2256
        %v2283 = vmul.f32 %v2186, %v2256
        %v2284 = vmul.f32 %v2187, %v2256
        %v2285 = vmul.f32 %v2188, %v2256
        %v2286 = vmul.f32 %v2189, %v2256
        %v2287 = vmul.f32 %v2190, %v2256
        %v2288 = vmul.f32 %v2191, %v2256
        %v2289 = vmul.f32 %v2192, %v2256
        %v2290 = vmul.f32 %v2193, %v2256
        %v2291 = vmul.f32 %v2194, %v2256
        %v2292 = vmul.f32 %v2195, %v2256
        %v2293 = vmul.f32 %v2196, %v2256
        %v2294 = vmul.f32 %v2197, %v2256
        %v2295 = vmul.f32 %v2198, %v2256
        %v2296 = vmul.f32 %v2199, %v2256
        %v2297 = vmul.f32 %v2200, %v2256
        %v2298 = vmul.f32 %v2201, %v2256
        %v2299 = vmul.f32 %v2202, %v2256
        %v2300 = vmul.f32 %v2203, %v2256
        %v2301 = vmul.f32 %v2204, %v2256
        %v2302 = vmul.f32 %v2205, %v2256
        %v2303 = vmul.f32 %v2206, %v2256
        %v2304 = vmul.f32 %v2207, %v2256
        %v2305 = vmul.f32 %v2208, %v2256
        %v2306 = vmul.f32 %v2209, %v2256
        %v2307 = vmul.f32 %v2210, %v2256
        %v2308 = vmul.f32 %v2211, %v2256
        %v2309 = vmul.f32 %v2212, %v2256
        %v2310 = vmul.f32 %v2213, %v2256
        %v2311 = vmul.f32 %v2214, %v2256
        %v2312 = vmul.f32 %v2215, %v2256
        %v2313 = vmul.f32 %v2216, %v2256
        %v2314 = vmul.f32 %v2217, %v2256
        %v2315 = vmul.f32 %v2218, %v2256
        %v2316 = vmul.f32 %v2219, %v2256
        %v2317 = vmul.f32 %v2220, %v2256
        %v2318 = vmul.f32 %v2221, %v2256
        %v2319 = vmul.f32 %v2222, %v2256
        %v2320 = vmul.f32 %v2223, %v2256
        %v2321 = vmul.f32 %v2224, %v2256
        %v2322 = vmul.f32 %v2225, %v2256
        %v2323 = vmul.f32 %v2226, %v2256
        %v2324 = vmul.f32 %v2227, %v2256
        %v2325 = vmul.f32 %v2228, %v2256
        %v2326 = vmul.f32 %v2229, %v2256
        %v2327 = vmul.f32 %v2230, %v2256
        %v2328 = vmul.f32 %v2231, %v2256
        %v2329 = vmul.f32 %v2232, %v2256
        %v2330 = vmul.f32 %v2233, %v2256
        %v2331 = vmul.f32 %v2234, %v2256
        %v2332 = vmul.f32 %v2235, %v2256
        %v2333 = vmul.f32 %v2236, %v2256
        %v2334 = vmul.f32 %v2237, %v2256
        %v2335 = vmul.f32 %v2238, %v2256
        %v2336 = vmul.f32 %v2239, %v2256
        %v2337 = vmul.f32 %v2240, %v2256
        %v2338 = vmul.f32 %v2241, %v2256
        %v2339 = vmul.f32 %v2242, %v2256
        %v2340 = vmul.f32 %v2243, %v2256
        %v2341 = vmul.f32 %v2244, %v2256
        %v2342 = vmul.f32 %v2245, %v2256
        %v2343 = vmul.f32 %v2246, %v2256
        %v2344 = vmul.f32 %v2247, %v2256
        %v2345 = vmul.f32 %v2248, %v2256
        %v2346 = vmul.f32 %v2249, %v2256
        %v2347 = vmul.f32 %v2250, %v2256
        %v2348 = vmul.f32 %v2251, %v2256
        %v2349 = vmul.f32 %v2252, %v2256
        %v2350 = vmul.f32 %v2253, %v2256
        %v2351 = vmul.f32 %v2254, %v2256
        %v2352 = vmul.f32 %v2255, %v2256
        %v2353 = vstv %s2159
        %v2354 = vadd.f32 %v2257, %v2353
        %v2355 = vadd.f32 %v2258, %v2353
        %v2356 = vadd.f32 %v2259, %v2353
        %v2357 = vadd.f32 %v2260, %v2353
        %v2358 = vadd.f32 %v2261, %v2353
        %v2359 = vadd.f32 %v2262, %v2353
        %v2360 = vadd.f32 %v2263, %v2353
        %v2361 = vadd.f32 %v2264, %v2353
        %v2362 = vadd.f32 %v2265, %v2353
        %v2363 = vadd.f32 %v2266, %v2353
        %v2364 = vadd.f32 %v2267, %v2353
        %v2365 = vadd.f32 %v2268, %v2353
        %v2366 = vadd.f32 %v2269, %v2353
        %v2367 = vadd.f32 %v2270, %v2353
        %v2368 = vadd.f32 %v2271, %v2353
        %v2369 = vadd.f32 %v2272, %v2353
        %v2370 = vadd.f32 %v2273, %v2353
        %v2371 = vadd.f32 %v2274, %v2353
        %v2372 = vadd.f32 %v2275, %v2353
        %v2373 = vadd.f32 %v2276, %v2353
        %v2374 = vadd.f32 %v2277, %v2353
        %v2375 = vadd.f32 %v2278, %v2353
        %v2376 = vadd.f32 %v2279, %v2353
        %v2377 = vadd.f32 %v2280, %v2353
        %v2378 = vadd.f32 %v2281, %v2353
        %v2379 = vadd.f32 %v2282, %v2353
        %v2380 = vadd.f32 %v2283, %v2353
        %v2381 = vadd.f32 %v2284, %v2353
        %v2382 = vadd.f32 %v2285, %v2353
        %v2383 = vadd.f32 %v2286, %v2353
        %v2384 = vadd.f32 %v2287, %v2353
        %v2385 = vadd.f32 %v2288, %v2353
        %v2386 = vadd.f32 %v2289, %v2353
        %v2387 = vadd.f32 %v2290, %v2353
        %v2388 = vadd.f32 %v2291, %v2353
        %v2389 = vadd.f32 %v2292, %v2353
        %v2390 = vadd.f32 %v2293, %v2353
        %v2391 = vadd.f32 %v2294, %v2353
        %v2392 = vadd.f32 %v2295, %v2353
        %v2393 = vadd.f32 %v2296, %v2353
        %v2394 = vadd.f32 %v2297, %v2353
        %v2395 = vadd.f32 %v2298, %v2353
        %v2396 = vadd.f32 %v2299, %v2353
        %v2397 = vadd.f32 %v2300, %v2353
        %v2398 = vadd.f32 %v2301, %v2353
        %v2399 = vadd.f32 %v2302, %v2353
        %v2400 = vadd.f32 %v2303, %v2353
        %v2401 = vadd.f32 %v2304, %v2353
        %v2402 = vadd.f32 %v2305, %v2353
        %v2403 = vadd.f32 %v2306, %v2353
        %v2404 = vadd.f32 %v2307, %v2353
        %v2405 = vadd.f32 %v2308, %v2353
        %v2406 = vadd.f32 %v2309, %v2353
        %v2407 = vadd.f32 %v2310, %v2353
        %v2408 = vadd.f32 %v2311, %v2353
        %v2409 = vadd.f32 %v2312, %v2353
        %v2410 = vadd.f32 %v2313, %v2353
        %v2411 = vadd.f32 %v2314, %v2353
        %v2412 = vadd.f32 %v2315, %v2353
        %v2413 = vadd.f32 %v2316, %v2353
        %v2414 = vadd.f32 %v2317, %v2353
        %v2415 = vadd.f32 %v2318, %v2353
        %v2416 = vadd.f32 %v2319, %v2353
        %v2417 = vadd.f32 %v2320, %v2353
        %v2418 = vadd.f32 %v2321, %v2353
        %v2419 = vadd.f32 %v2322, %v2353
        %v2420 = vadd.f32 %v2323, %v2353
        %v2421 = vadd.f32 %v2324, %v2353
        %v2422 = vadd.f32 %v2325, %v2353
        %v2423 = vadd.f32 %v2326, %v2353
        %v2424 = vadd.f32 %v2327, %v2353
        %v2425 = vadd.f32 %v2328, %v2353
        %v2426 = vadd.f32 %v2329, %v2353
        %v2427 = vadd.f32 %v2330, %v2353
        %v2428 = vadd.f32 %v2331, %v2353
        %v2429 = vadd.f32 %v2332, %v2353
        %v2430 = vadd.f32 %v2333, %v2353
        %v2431 = vadd.f32 %v2334, %v2353
        %v2432 = vadd.f32 %v2335, %v2353
        %v2433 = vadd.f32 %v2336, %v2353
        %v2434 = vadd.f32 %v2337, %v2353
        %v2435 = vadd.f32 %v2338, %v2353
        %v2436 = vadd.f32 %v2339, %v2353
        %v2437 = vadd.f32 %v2340, %v2353
        %v2438 = vadd.f32 %v2341, %v2353
        %v2439 = vadd.f32 %v2342, %v2353
        %v2440 = vadd.f32 %v2343, %v2353
        %v2441 = vadd.f32 %v2344, %v2353
        %v2442 = vadd.f32 %v2345, %v2353
        %v2443 = vadd.f32 %v2346, %v2353
        %v2444 = vadd.f32 %v2347, %v2353
        %v2445 = vadd.f32 %v2348, %v2353
        %v2446 = vadd.f32 %v2349, %v2353
        %v2447 = vadd.f32 %v2350, %v2353
        %v2448 = vadd.f32 %v2351, %v2353
        %v2449 = vadd.f32 %v2352, %v2353
        %2450 = vst [vmem:[%s259] sm:$0xff] %v2354
        %2451 = vst [vmem:[%s259 + $0x8] sm:$0xff] %v2355
        %2452 = vst [vmem:[%s259 + $0x10] sm:$0xff] %v2356
        %2453 = vst [vmem:[%s259 + $0x18] sm:$0xff] %v2357
        %2454 = vst [vmem:[%s259 + $0x20] sm:$0xff] %v2358
        %2455 = vst [vmem:[%s259 + $0x28] sm:$0xff] %v2359
        %2456 = vst [vmem:[%s259 + $0x30] sm:$0xff] %v2360
        %2457 = vst [vmem:[%s259 + $0x38] sm:$0xff] %v2361
        %2458 = vst [vmem:[%s259 + $0x40] sm:$0xff] %v2362
        %2459 = vst [vmem:[%s259 + $0x48] sm:$0xff] %v2363
        %2460 = vst [vmem:[%s259 + $0x50] sm:$0xff] %v2364
        %2461 = vst [vmem:[%s259 + $0x58] sm:$0xff] %v2365
        %2462 = vst [vmem:[%s259 + $0x60] sm:$0xff] %v2366
        %2463 = vst [vmem:[%s259 + $0x68] sm:$0xff] %v2367
        %2464 = vst [vmem:[%s259 + $0x70] sm:$0xff] %v2368
        %2465 = vst [vmem:[%s259 + $0x78] sm:$0xff] %v2369
        %2466 = vst [vmem:[%s259 + $0x80] sm:$0xff] %v2370
        %2467 = vst [vmem:[%s259 + $0x88] sm:$0xff] %v2371
        %2468 = vst [vmem:[%s259 + $0x90] sm:$0xff] %v2372
        %2469 = vst [vmem:[%s259 + $0x98] sm:$0xff] %v2373
        %2470 = vst [vmem:[%s259 + $0xa0] sm:$0xff] %v2374
        %2471 = vst [vmem:[%s259 + $0xa8] sm:$0xff] %v2375
        %2472 = vst [vmem:[%s259 + $0xb0] sm:$0xff] %v2376
        %2473 = vst [vmem:[%s259 + $0xb8] sm:$0xff] %v2377
        %2474 = vst [vmem:[%s259 + $0xc0] sm:$0xff] %v2378
        %2475 = vst [vmem:[%s259 + $0xc8] sm:$0xff] %v2379
        %2476 = vst [vmem:[%s259 + $0xd0] sm:$0xff] %v2380
        %2477 = vst [vmem:[%s259 + $0xd8] sm:$0xff] %v2381
        %2478 = vst [vmem:[%s259 + $0xe0] sm:$0xff] %v2382
        %2479 = vst [vmem:[%s259 + $0xe8] sm:$0xff] %v2383
        %2480 = vst [vmem:[%s259 + $0xf0] sm:$0xff] %v2384
        %2481 = vst [vmem:[%s259 + $0xf8] sm:$0xff] %v2385
        %2482 = vst [vmem:[%s259 + $0x100] sm:$0xff] %v2386
        %2483 = vst [vmem:[%s259 + $0x108] sm:$0xff] %v2387
        %2484 = vst [vmem:[%s259 + $0x110] sm:$0xff] %v2388
        %2485 = vst [vmem:[%s259 + $0x118] sm:$0xff] %v2389
        %2486 = vst [vmem:[%s259 + $0x120] sm:$0xff] %v2390
        %2487 = vst [vmem:[%s259 + $0x128] sm:$0xff] %v2391
        %2488 = vst [vmem:[%s259 + $0x130] sm:$0xff] %v2392
        %2489 = vst [vmem:[%s259 + $0x138] sm:$0xff] %v2393
        %2490 = vst [vmem:[%s259 + $0x140] sm:$0xff] %v2394
        %2491 = vst [vmem:[%s259 + $0x148] sm:$0xff] %v2395
        %2492 = vst [vmem:[%s259 + $0x150] sm:$0xff] %v2396
        %2493 = vst [vmem:[%s259 + $0x158] sm:$0xff] %v2397
        %2494 = vst [vmem:[%s259 + $0x160] sm:$0xff] %v2398
        %2495 = vst [vmem:[%s259 + $0x168] sm:$0xff] %v2399
        %2496 = vst [vmem:[%s259 + $0x170] sm:$0xff] %v2400
        %2497 = vst [vmem:[%s259 + $0x178] sm:$0xff] %v2401
        %2498 = vst [vmem:[%s259 + $0x180] sm:$0xff] %v2402
        %2499 = vst [vmem:[%s259 + $0x188] sm:$0xff] %v2403
        %2500 = vst [vmem:[%s259 + $0x190] sm:$0xff] %v2404
        %2501 = vst [vmem:[%s259 + $0x198] sm:$0xff] %v2405
        %2502 = vst [vmem:[%s259 + $0x1a0] sm:$0xff] %v2406
        %2503 = vst [vmem:[%s259 + $0x1a8] sm:$0xff] %v2407
        %2504 = vst [vmem:[%s259 + $0x1b0] sm:$0xff] %v2408
        %2505 = vst [vmem:[%s259 + $0x1b8] sm:$0xff] %v2409
        %2506 = vst [vmem:[%s259 + $0x1c0] sm:$0xff] %v2410
        %2507 = vst [vmem:[%s259 + $0x1c8] sm:$0xff] %v2411
        %2508 = vst [vmem:[%s259 + $0x1d0] sm:$0xff] %v2412
        %2509 = vst [vmem:[%s259 + $0x1d8] sm:$0xff] %v2413
        %2510 = vst [vmem:[%s259 + $0x1e0] sm:$0xff] %v2414
        %2511 = vst [vmem:[%s259 + $0x1e8] sm:$0xff] %v2415
        %2512 = vst [vmem:[%s259 + $0x1f0] sm:$0xff] %v2416
        %2513 = vst [vmem:[%s259 + $0x1f8] sm:$0xff] %v2417
        %2514 = vst [vmem:[%s259 + $0x200] sm:$0xff] %v2418
        %2515 = vst [vmem:[%s259 + $0x208] sm:$0xff] %v2419
        %2516 = vst [vmem:[%s259 + $0x210] sm:$0xff] %v2420
        %2517 = vst [vmem:[%s259 + $0x218] sm:$0xff] %v2421
        %2518 = vst [vmem:[%s259 + $0x220] sm:$0xff] %v2422
        %2519 = vst [vmem:[%s259 + $0x228] sm:$0xff] %v2423
        %2520 = vst [vmem:[%s259 + $0x230] sm:$0xff] %v2424
        %2521 = vst [vmem:[%s259 + $0x238] sm:$0xff] %v2425
        %2522 = vst [vmem:[%s259 + $0x240] sm:$0xff] %v2426
        %2523 = vst [vmem:[%s259 + $0x248] sm:$0xff] %v2427
        %2524 = vst [vmem:[%s259 + $0x250] sm:$0xff] %v2428
        %2525 = vst [vmem:[%s259 + $0x258] sm:$0xff] %v2429
        %2526 = vst [vmem:[%s259 + $0x260] sm:$0xff] %v2430
        %2527 = vst [vmem:[%s259 + $0x268] sm:$0xff] %v2431
        %2528 = vst [vmem:[%s259 + $0x270] sm:$0xff] %v2432
        %2529 = vst [vmem:[%s259 + $0x278] sm:$0xff] %v2433
        %2530 = vst [vmem:[%s259 + $0x280] sm:$0xff] %v2434
        %2531 = vst [vmem:[%s259 + $0x288] sm:$0xff] %v2435
        %2532 = vst [vmem:[%s259 + $0x290] sm:$0xff] %v2436
        %2533 = vst [vmem:[%s259 + $0x298] sm:$0xff] %v2437
        %2534 = vst [vmem:[%s259 + $0x2a0] sm:$0xff] %v2438
        %2535 = vst [vmem:[%s259 + $0x2a8] sm:$0xff] %v2439
        %2536 = vst [vmem:[%s259 + $0x2b0] sm:$0xff] %v2440
        %2537 = vst [vmem:[%s259 + $0x2b8] sm:$0xff] %v2441
        %2538 = vst [vmem:[%s259 + $0x2c0] sm:$0xff] %v2442
        %2539 = vst [vmem:[%s259 + $0x2c8] sm:$0xff] %v2443
        %2540 = vst [vmem:[%s259 + $0x2d0] sm:$0xff] %v2444
        %2541 = vst [vmem:[%s259 + $0x2d8] sm:$0xff] %v2445
        %2542 = vst [vmem:[%s259 + $0x2e0] sm:$0xff] %v2446
        %2543 = vst [vmem:[%s259 + $0x2e8] sm:$0xff] %v2447
        %2544 = vst [vmem:[%s259 + $0x2f0] sm:$0xff] %v2448
        %2545 = vst [vmem:[%s259 + $0x2f8] sm:$0xff] %v2449
        %2570 = vrot.lane.b32.xlu0 %v894, 1
        %v2571 = vpop.permute.xlu0 %2570
        %2572 = vrot.lane.b32.xlu0 %v896, 1
        %v2573 = vpop.permute.xlu0 %2572
        %2574 = vrot.lane.b32.xlu0 %v898, 1
        %v2575 = vpop.permute.xlu0 %2574
        %2576 = vrot.lane.b32.xlu0 %v900, 1
        %v2577 = vpop.permute.xlu0 %2576
        %2578 = vrot.lane.b32.xlu0 %v902, 1
        %v2579 = vpop.permute.xlu0 %2578
        %2580 = vrot.lane.b32.xlu0 %v904, 1
        %v2581 = vpop.permute.xlu0 %2580
        %2582 = vrot.lane.b32.xlu0 %v906, 1
        %v2583 = vpop.permute.xlu0 %2582
        %2584 = vrot.lane.b32.xlu0 %v908, 1
        %v2585 = vpop.permute.xlu0 %2584
        %2586 = vrot.lane.b32.xlu0 %v910, 1
        %v2587 = vpop.permute.xlu0 %2586
        %2588 = vrot.lane.b32.xlu0 %v912, 1
        %v2589 = vpop.permute.xlu0 %2588
        %2590 = vrot.lane.b32.xlu0 %v914, 1
        %v2591 = vpop.permute.xlu0 %2590
        %2592 = vrot.lane.b32.xlu0 %v916, 1
        %v2593 = vpop.permute.xlu0 %2592
        %2594 = vrot.lane.b32.xlu0 %v918, 1
        %v2595 = vpop.permute.xlu0 %2594
        %2596 = vrot.lane.b32.xlu0 %v920, 1
        %v2597 = vpop.permute.xlu0 %2596
        %2598 = vrot.lane.b32.xlu0 %v922, 1
        %v2599 = vpop.permute.xlu0 %2598
        %2600 = vrot.lane.b32.xlu0 %v924, 1
        %v2601 = vpop.permute.xlu0 %2600
        %2602 = vrot.lane.b32.xlu0 %v926, 1
        %v2603 = vpop.permute.xlu0 %2602
        %2604 = vrot.lane.b32.xlu0 %v928, 1
        %v2605 = vpop.permute.xlu0 %2604
        %2606 = vrot.lane.b32.xlu0 %v930, 1
        %v2607 = vpop.permute.xlu0 %2606
        %2608 = vrot.lane.b32.xlu0 %v932, 1
        %v2609 = vpop.permute.xlu0 %2608
        %2610 = vrot.lane.b32.xlu0 %v934, 1
        %v2611 = vpop.permute.xlu0 %2610
        %2612 = vrot.lane.b32.xlu0 %v936, 1
        %v2613 = vpop.permute.xlu0 %2612
        %2614 = vrot.lane.b32.xlu0 %v938, 1
        %v2615 = vpop.permute.xlu0 %2614
        %2616 = vrot.lane.b32.xlu0 %v940, 1
        %v2617 = vpop.permute.xlu0 %2616
        %vm2642 = vcmask 7168
        %2643 = vst.msk [vmem:[#allocation2] sm:$0xff] %vm2642, %v2571
        %2644 = vst.msk [vmem:[#allocation2 + $0x8] sm:$0xff] %vm2642, %v2573
        %2645 = vst.msk [vmem:[#allocation2 + $0x10] sm:$0xff] %vm2642, %v2575
        %2646 = vst.msk [vmem:[#allocation2 + $0x18] sm:$0xff] %vm2642, %v2577
        %2647 = vst.msk [vmem:[#allocation2 + $0x20] sm:$0xff] %vm2642, %v2579
        %2648 = vst.msk [vmem:[#allocation2 + $0x28] sm:$0xff] %vm2642, %v2581
        %2649 = vst.msk [vmem:[#allocation2 + $0x30] sm:$0xff] %vm2642, %v2583
        %2650 = vst.msk [vmem:[#allocation2 + $0x38] sm:$0xff] %vm2642, %v2585
        %2651 = vst.msk [vmem:[#allocation2 + $0x40] sm:$0xff] %vm2642, %v2587
        %2652 = vst.msk [vmem:[#allocation2 + $0x48] sm:$0xff] %vm2642, %v2589
        %2653 = vst.msk [vmem:[#allocation2 + $0x50] sm:$0xff] %vm2642, %v2591
        %2654 = vst.msk [vmem:[#allocation2 + $0x58] sm:$0xff] %vm2642, %v2593
        %2655 = vst.msk [vmem:[#allocation2 + $0x60] sm:$0xff] %vm2642, %v2595
        %2656 = vst.msk [vmem:[#allocation2 + $0x68] sm:$0xff] %vm2642, %v2597
        %2657 = vst.msk [vmem:[#allocation2 + $0x70] sm:$0xff] %vm2642, %v2599
        %2658 = vst.msk [vmem:[#allocation2 + $0x78] sm:$0xff] %vm2642, %v2601
        %2659 = vst.msk [vmem:[#allocation2 + $0x80] sm:$0xff] %vm2642, %v2603
        %2660 = vst.msk [vmem:[#allocation2 + $0x88] sm:$0xff] %vm2642, %v2605
        %2661 = vst.msk [vmem:[#allocation2 + $0x90] sm:$0xff] %vm2642, %v2607
        %2662 = vst.msk [vmem:[#allocation2 + $0x98] sm:$0xff] %vm2642, %v2609
        %2663 = vst.msk [vmem:[#allocation2 + $0xa0] sm:$0xff] %vm2642, %v2611
        %2664 = vst.msk [vmem:[#allocation2 + $0xa8] sm:$0xff] %vm2642, %v2613
        %2665 = vst.msk [vmem:[#allocation2 + $0xb0] sm:$0xff] %vm2642, %v2615
        %2666 = vst.msk [vmem:[#allocation2 + $0xb8] sm:$0xff] %vm2642, %v2617
        %2691 = vrot.lane.b32.xlu0 %v1583, 1
        %v2692 = vpop.permute.xlu0 %2691
        %2693 = vrot.lane.b32.xlu0 %v1585, 1
        %v2694 = vpop.permute.xlu0 %2693
        %2695 = vrot.lane.b32.xlu0 %v1587, 1
        %v2696 = vpop.permute.xlu0 %2695
        %2697 = vrot.lane.b32.xlu0 %v1589, 1
        %v2698 = vpop.permute.xlu0 %2697
        %2699 = vrot.lane.b32.xlu0 %v1591, 1
        %v2700 = vpop.permute.xlu0 %2699
        %2701 = vrot.lane.b32.xlu0 %v1593, 1
        %v2702 = vpop.permute.xlu0 %2701
        %2703 = vrot.lane.b32.xlu0 %v1595, 1
        %v2704 = vpop.permute.xlu0 %2703
        %2705 = vrot.lane.b32.xlu0 %v1597, 1
        %v2706 = vpop.permute.xlu0 %2705
        %2707 = vrot.lane.b32.xlu0 %v1599, 1
        %v2708 = vpop.permute.xlu0 %2707
        %2709 = vrot.lane.b32.xlu0 %v1601, 1
        %v2710 = vpop.permute.xlu0 %2709
        %2711 = vrot.lane.b32.xlu0 %v1603, 1
        %v2712 = vpop.permute.xlu0 %2711
        %2713 = vrot.lane.b32.xlu0 %v1605, 1
        %v2714 = vpop.permute.xlu0 %2713
        %2715 = vrot.lane.b32.xlu0 %v1607, 1
        %v2716 = vpop.permute.xlu0 %2715
        %2717 = vrot.lane.b32.xlu0 %v1609, 1
        %v2718 = vpop.permute.xlu0 %2717
        %2719 = vrot.lane.b32.xlu0 %v1611, 1
        %v2720 = vpop.permute.xlu0 %2719
        %2721 = vrot.lane.b32.xlu0 %v1613, 1
        %v2722 = vpop.permute.xlu0 %2721
        %2723 = vrot.lane.b32.xlu0 %v1615, 1
        %v2724 = vpop.permute.xlu0 %2723
        %2725 = vrot.lane.b32.xlu0 %v1617, 1
        %v2726 = vpop.permute.xlu0 %2725
        %2727 = vrot.lane.b32.xlu0 %v1619, 1
        %v2728 = vpop.permute.xlu0 %2727
        %2729 = vrot.lane.b32.xlu0 %v1621, 1
        %v2730 = vpop.permute.xlu0 %2729
        %2731 = vrot.lane.b32.xlu0 %v1623, 1
        %v2732 = vpop.permute.xlu0 %2731
        %2733 = vrot.lane.b32.xlu0 %v1625, 1
        %v2734 = vpop.permute.xlu0 %2733
        %2735 = vrot.lane.b32.xlu0 %v1627, 1
        %v2736 = vpop.permute.xlu0 %2735
        %2737 = vrot.lane.b32.xlu0 %v1629, 1
        %v2738 = vpop.permute.xlu0 %2737
        %2763 = vst.msk [vmem:[#allocation3] sm:$0xff] %vm2642, %v2692
        %2764 = vst.msk [vmem:[#allocation3 + $0x8] sm:$0xff] %vm2642, %v2694
        %2765 = vst.msk [vmem:[#allocation3 + $0x10] sm:$0xff] %vm2642, %v2696
        %2766 = vst.msk [vmem:[#allocation3 + $0x18] sm:$0xff] %vm2642, %v2698
        %2767 = vst.msk [vmem:[#allocation3 + $0x20] sm:$0xff] %vm2642, %v2700
        %2768 = vst.msk [vmem:[#allocation3 + $0x28] sm:$0xff] %vm2642, %v2702
        %2769 = vst.msk [vmem:[#allocation3 + $0x30] sm:$0xff] %vm2642, %v2704
        %2770 = vst.msk [vmem:[#allocation3 + $0x38] sm:$0xff] %vm2642, %v2706
        %2771 = vst.msk [vmem:[#allocation3 + $0x40] sm:$0xff] %vm2642, %v2708
        %2772 = vst.msk [vmem:[#allocation3 + $0x48] sm:$0xff] %vm2642, %v2710
        %2773 = vst.msk [vmem:[#allocation3 + $0x50] sm:$0xff] %vm2642, %v2712
        %2774 = vst.msk [vmem:[#allocation3 + $0x58] sm:$0xff] %vm2642, %v2714
        %2775 = vst.msk [vmem:[#allocation3 + $0x60] sm:$0xff] %vm2642, %v2716
        %2776 = vst.msk [vmem:[#allocation3 + $0x68] sm:$0xff] %vm2642, %v2718
        %2777 = vst.msk [vmem:[#allocation3 + $0x70] sm:$0xff] %vm2642, %v2720
        %2778 = vst.msk [vmem:[#allocation3 + $0x78] sm:$0xff] %vm2642, %v2722
        %2779 = vst.msk [vmem:[#allocation3 + $0x80] sm:$0xff] %vm2642, %v2724
        %2780 = vst.msk [vmem:[#allocation3 + $0x88] sm:$0xff] %vm2642, %v2726
        %2781 = vst.msk [vmem:[#allocation3 + $0x90] sm:$0xff] %vm2642, %v2728
        %2782 = vst.msk [vmem:[#allocation3 + $0x98] sm:$0xff] %vm2642, %v2730
        %2783 = vst.msk [vmem:[#allocation3 + $0xa0] sm:$0xff] %vm2642, %v2732
        %2784 = vst.msk [vmem:[#allocation3 + $0xa8] sm:$0xff] %vm2642, %v2734
        %2785 = vst.msk [vmem:[#allocation3 + $0xb0] sm:$0xff] %vm2642, %v2736
        %2786 = vst.msk [vmem:[#allocation3 + $0xb8] sm:$0xff] %vm2642, %v2738
        %s2787 = sand.u32 %s114, 1
        %s2788 = scalar_lea.sflag [#allocation6], %s2787
        %s2789 = sand.u32 %s114, 1
        %s2790 = smul.addr %s2789, 768
        %s2791 = scalar_lea.vmem [#allocation11], %s2790
        // Predicated region
        $region49: #{tpu_custom_call.1} parent=31 // pred_check
          %p2792 = pneg %p124
        $region50: #{tpu_custom_call.1} parent=31 // pred_check_branch
          %2794 = sbr.rel (%p2792) target = $region52
        $region51: #{tpu_custom_call.1} parent=31 // pred_region
          #allocation15 [shape = 'u32[6]{0}', space=smem, size = 0x18, scoped, tag = 'DMA stride descriptor']
          %s2795 = smul.u32 24, %s26
          %s2796 = smul.u32 2, %s27
          %s2798 = ssub.s32 12288, 12288
          %2799 = vsyncadd %s2788, %s2798
          %s2800 = smul.addr %s2795, 4
          %s2801 = sadd.s32 %s2796, %s2800
          %s2802 = smul.addr %s2801, 128
          %s2803 = scalar_lea.hbm %s3, %s2802
          %s2805 = sshll.u32 1, 14
          %s2806 = sxor.u32 4294967295, %s2805
          %s2809 = sshll.u32 7, 18
          %s2810 = sxor.u32 4294967295, %s2809
          %s2811 = sand.u32 0, %s2810
          %s2813 = sor.u32 %s2811, 0
          %s2815 = sshll.u32 3, 24
          %s2816 = sxor.u32 4294967295, %s2815
          %s2817 = sand.u32 %s2813, %s2816
          %s2819 = sor.u32 %s2817, 0
          %s2820 = sshll.u32 %s2791, 4
          %s2821 = int_to_ptr.vmem [resolvable:$true] %s2820
          %2827 = sst [smem:[#allocation15]] 6144
          %s2828 = scalar_lea.smem [#allocation15], 1
          %2829 = sst [smem:[%s2828]] 24576
          %s2830 = scalar_lea.smem [#allocation15], 2
          %2831 = sst [smem:[%s2830]] 24
          %s2832 = scalar_lea.smem [#allocation15], 3
          %2833 = sst [smem:[%s2832]] 256
          %s2834 = scalar_lea.smem [#allocation15], 4
          %2835 = sst [smem:[%s2834]] 512
          %s2836 = scalar_lea.smem [#allocation15], 5
          %2837 = sst [smem:[%s2836]] 16
          %2839 = dma.general %s2821, 12288, %s2803, %s2788, [#allocation14], [#allocation15], %s2819, 0
        $region52: #{tpu_custom_call.1} parent=31 // pred_fallthru
          _
      $region32: #{tpu_custom_call.1} parent=5 // pred_fallthru
        _
      %p2840 = scmp.le.s32.totalorder 2, %s17
      // Predicated region
      $region53: #{tpu_custom_call.1} parent=5 // pred_check
        %p2841 = pneg %p2840
      $region54: #{tpu_custom_call.1} parent=5 // pred_check_branch
        %2843 = sbr.rel (%p2841) target = $region56
      $region55: #{tpu_custom_call.1} parent=5 // pred_region
        %s2844 = ssub.s32 %s17, 2
        // Predicated region
        $region57: #{tpu_custom_call.1} parent=55 // pred_check
          %p2845 = pneg %p130
        $region58: #{tpu_custom_call.1} parent=55 // pred_check_branch
          %2847 = sbr.rel (%p2845) target = $region60
        $region59: #{tpu_custom_call.1} parent=55 // pred_region
          %s2848 = sand.u32 %s115, 1
          %s2849 = scalar_lea.sflag [#allocation6], %s2848
          %s2850 = sand.u32 %s115, 1
          %s2851 = smul.addr %s2850, 768
          %s2852 = scalar_lea.vmem [#allocation11], %s2851
          %2853 = dma.done %s2849, 12288
        $region60: #{tpu_custom_call.1} parent=55 // pred_fallthru
          _
      $region56: #{tpu_custom_call.1} parent=5 // pred_fallthru
        _
    $region6: #{tpu_custom_call.1} parent=1 // loop_footer
      %s21 = sadd.s32 1, %s17
    $region7: #{tpu_custom_call.1} parent=1 // loop_footer_branch
      %16 = sbr.rel target = $region3
    $region8: #{tpu_custom_call.1} parent=1 // loop_exit
      _
    %2854 = vsyncpa [#allocation5], 1
    %s2855 = scalar_lea.sflag [#allocation5], 1
    %2856 = vsyncpa %s2855, 1
    %2857 = vsyncpa [#allocation10], 1
    %s2858 = scalar_lea.sflag [#allocation10], 1
    %2859 = vsyncpa %s2858, 1
    %2860 = vsyncpa [#allocation6], 1
    %s2861 = scalar_lea.sflag [#allocation6], 1
    %2862 = vsyncpa %s2861, 1
    %2863 = vsyncpa [#allocation7], 1
    %s2864 = scalar_lea.sflag [#allocation7], 1
    %2865 = vsyncpa %s2864, 1

</llo_original>
